<compile_context>
chip_gen: v7x
topology: tpu7x:2x2x1
jax: 0.10.0
libtpu: 0.0.40
codegen_flags: <defaults>
</compile_context>

<pallas_src>
import functools

import jax
import jax.numpy as jnp
from jax import lax
from jax.experimental import pallas as pl
from jax.experimental.pallas import tpu as pltpu


# ---------------------------------------------------------------------------
# Pallas kernel: fused (conv-as-GEMM) + per-channel affine + optional ReLU
# ---------------------------------------------------------------------------
def _fused_conv_kernel(p_ref, w_ref, scale_ref, shift_ref, o_ref, *, apply_relu):
    # p_ref:     (1, K, St)    im2col patches for one image / spatial tile
    # w_ref:     (Cout, K)     flattened conv weights (resident across grid)
    # scale_ref: (Cout, 1)     folded gamma / sqrt(var + eps)   (or 1)
    # shift_ref: (Cout, 1)     folded bias - scale * moving_mean (or conv bias)
    # o_ref:     (1, Cout, St) lane-dense output tile
    acc = jnp.dot(w_ref[...], p_ref[0],
                  preferred_element_type=jnp.float32)           # MXU, f32 acc
    y = acc * scale_ref[...] + shift_ref[...]                   # lane-broadcast on VPU
    if apply_relu:
        y = jnp.maximum(y, 0.0)
    o_ref[0] = y.astype(o_ref.dtype)


def _pick_spatial_tile(s, max_tile=1024):
    """Largest multiple-of-128 divisor of s not exceeding max_tile (or s)."""
    if s <= max_tile:
        return s
    for t in range(max_tile - max_tile % 128, 127, -128):
        if s % t == 0:
            return t
    return s  # fallback: whole row (still correct)


def conv3x3_affine_act(x, w, scale, shift, *, apply_relu):
    """y = act(scale[c] * conv3x3_same(x, w)[:, c] + shift[c]) in NCHW layout."""
    n, cin, h, wdt = x.shape
    cout = w.shape[0]
    assert w.shape == (cout, cin, 3, 3)
    s = h * wdt
    k = cin * 9

    # ---- plain-JAX layout glue (no FLOPs) ---------------------------------
    xp = jnp.pad(x, ((0, 0), (0, 0), (1, 1), (1, 1)))
    cols = [xp[:, :, dh:dh + h, dw:dw + wdt]
            for dh in range(3) for dw in range(3)]               # 9 x (N,Cin,H,W)
    patches = jnp.stack(cols, axis=2).reshape(n, k, s)           # (N, Cin*9, H*W)
    w_mat = w.reshape(cout, k).astype(x.dtype)                   # matches ci*9+dh*3+dw
    scale2 = scale.reshape(cout, 1).astype(jnp.float32)
    shift2 = shift.reshape(cout, 1).astype(jnp.float32)

    st = _pick_spatial_tile(s)
    grid = (n, s // st)

    kernel = functools.partial(_fused_conv_kernel, apply_relu=apply_relu)
    out = pl.pallas_call(
        kernel,
        out_shape=jax.ShapeDtypeStruct((n, cout, s), x.dtype),
        grid_spec=pltpu.PrefetchScalarGridSpec(
            num_scalar_prefetch=0,
            grid=grid,
            in_specs=[
                pl.BlockSpec((1, k, st), lambda i, j: (i, 0, j)),   # patches
                pl.BlockSpec((cout, k), lambda i, j: (0, 0)),       # weights
                pl.BlockSpec((cout, 1), lambda i, j: (0, 0)),       # scale
                pl.BlockSpec((cout, 1), lambda i, j: (0, 0)),       # shift
            ],
            out_specs=pl.BlockSpec((1, cout, st), lambda i, j: (i, 0, j)),
        ),
        compiler_params=pltpu.CompilerParams(
            dimension_semantics=("parallel", "parallel"),
        ),
    )(patches, w_mat, scale2, shift2)
    return out.reshape(n, cout, h, wdt)


# ---------------------------------------------------------------------------
# FullConvNet: parameters, Pallas forward, plain-JAX reference
# ---------------------------------------------------------------------------
_BNORM_EPS = 1e-5  # module's _bnorm_epsilon


def init_fullconvnet_params(key, num_levels=17, width=64):
    """Deterministic parameters mirroring FullConvNet's layer layout.

    bnorm_decay / flag_train only affect training-time statistics updates, not
    the inference forward pass implemented here.
    """
    f_in = [1] + [width] * (num_levels - 1)
    f_out = [width] * (num_levels - 1) + [1]
    bnorm = [False] + [True] * (num_levels - 2) + [False]
    conv_bias = [True] + [False] * (num_levels - 2) + [True]
    relu = [True] * (num_levels - 1) + [False]

    layers = []
    for i in range(num_levels):
        key, kw, kb, kg, km, kv, ka = jax.random.split(key, 7)
        cin, cout = f_in[i], f_out[i]
        w = jax.random.normal(kw, (cout, cin, 3, 3), jnp.float32) * jnp.sqrt(
            2.0 / (9.0 * cin))
        lyr = dict(w=w, bnorm=bnorm[i], relu=relu[i],
                   conv_b=None, gamma=None, mmean=None, mvar=None, add_b=None)
        if conv_bias[i]:
            lyr["conv_b"] = 0.1 * jax.random.normal(kb, (cout,), jnp.float32)
        if bnorm[i]:
            # Module init is gamma=mean=var=1, AddBias=0; use deterministic
            # non-trivial values so the fused affine path is actually exercised.
            lyr["gamma"] = 1.0 + 0.1 * jax.random.normal(kg, (cout,), jnp.float32)
            lyr["mmean"] = 0.1 * jax.random.normal(km, (cout,), jnp.float32)
            lyr["mvar"] = 1.0 + 0.1 * jnp.abs(
                jax.random.normal(kv, (cout,), jnp.float32))
        if not conv_bias[i]:
            lyr["add_b"] = 0.1 * jax.random.normal(ka, (cout,), jnp.float32)

        # Fold Conv2d bias / CustomBatchNorm / AddBias into (scale, shift).
        cout_ones = jnp.ones((cout,), jnp.float32)
        scale = cout_ones
        shift = lyr["conv_b"] if lyr["conv_b"] is not None else jnp.zeros(
            (cout,), jnp.float32)
        if lyr["bnorm"]:
            inv_std = 1.0 / jnp.sqrt(lyr["mvar"] + _BNORM_EPS)
            scale = lyr["gamma"] * inv_std
            shift = scale * (shift - lyr["mmean"])
        if lyr["add_b"] is not None:
            shift = shift + lyr["add_b"]
        lyr["scale"] = scale
        lyr["shift"] = shift
        layers.append(lyr)
    return layers


def build_forward(relu_flags):
    relu_flags = tuple(bool(r) for r in relu_flags)

    @jax.jit
    def forward(x, weights, scales, shifts):
        for w, sc, sh, r in zip(weights, scales, shifts, relu_flags):
            x = conv3x3_affine_act(x, w, sc, sh, apply_relu=r)
        return x

    return forward


def reference_forward(x, layers):
    """Literal module math: Conv2d -> CustomBatchNorm -> AddBias -> act."""
    for lyr in layers:
        c = lyr["w"].shape[0]
        y = lax.conv_general_dilated(
            x, lyr["w"], window_strides=(1, 1), padding=((1, 1), (1, 1)),
            dimension_numbers=("NCHW", "OIHW", "NCHW"),
            precision=lax.Precision.HIGHEST)
        if lyr["conv_b"] is not None:
            y = y + lyr["conv_b"].reshape(1, c, 1, 1)
        if lyr["bnorm"]:
            y = (y - lyr["mmean"].reshape(1, c, 1, 1)) / jnp.sqrt(
                lyr["mvar"].reshape(1, c, 1, 1) + _BNORM_EPS)
            y = lyr["gamma"].reshape(1, c, 1, 1) * y
        if lyr["add_b"] is not None:
            y = y + lyr["add_b"].reshape(1, c, 1, 1)
        if lyr["relu"]:
            y = jnp.maximum(y, 0.0)
        x = y
    return x


if __name__ == "__main__":
    key = jax.random.PRNGKey(0)
    key, kx = jax.random.split(key)

    # FullConvNet consumes single-channel images: (N, 1, H, W).
    N, H, W = 2, 16, 16
    NUM_LEVELS = 17
    x = jax.random.normal(kx, (N, 1, H, W), dtype=jnp.float32)

    layers = init_fullconvnet_params(key, num_levels=NUM_LEVELS)
    weights = tuple(l["w"] for l in layers)
    scales = tuple(l["scale"] for l in layers)
    shifts = tuple(l["shift"] for l in layers)
    relus = tuple(l["relu"] for l in layers)

    forward = build_forward(relus)
    out = jax.block_until_ready(forward(x, weights, scales, shifts))
    ref = jax.block_until_ready(reference_forward(x, layers))

    assert out.shape == (N, 1, H, W) and out.dtype == x.dtype
    assert bool(jnp.all(jnp.isfinite(out)))
    max_err = float(jnp.max(jnp.abs(out - ref)))
    assert jnp.allclose(out, ref, atol=3e-2, rtol=3e-2), f"max |err| = {max_err}"

    print("KERNEL_OK")
</pallas_src>

<mosaic_0001>
module attributes {stable_mosaic.version = 11 : i64} {
  func.func @_fused_conv_kernel(%arg0: i32, %arg1: i32, %arg2: memref<1x9x256xf32, #tpu.memory_space<vmem>>, %arg3: memref<64x9xf32, #tpu.memory_space<vmem>>, %arg4: memref<64x1xf32, #tpu.memory_space<vmem>>, %arg5: memref<64x1xf32, #tpu.memory_space<vmem>>, %arg6: memref<1x64x256xf32, #tpu.memory_space<vmem>>) attributes {dimension_semantics = [#tpu.dimension_semantics<parallel>, #tpu.dimension_semantics<parallel>], iteration_bounds = array<i64: 2, 1>, scalar_prefetch = 0 : i64, scratch_operands = 0 : i64, tpu.core_type = #tpu.core_type<tc>, window_params = [{transform_indices = @transform_0, window_bounds = array<i64: 1, 9, 256>}, {pipeline_mode = #tpu.pipeline_mode<synchronous>, transform_indices = @transform_1, window_bounds = array<i64: 64, 9>}, {pipeline_mode = #tpu.pipeline_mode<synchronous>, transform_indices = @transform_2, window_bounds = array<i64: 64, 1>}, {pipeline_mode = #tpu.pipeline_mode<synchronous>, transform_indices = @transform_3, window_bounds = array<i64: 64, 1>}, {transform_indices = @transform_4, window_bounds = array<i64: 1, 64, 256>}]} {
    %c0 = arith.constant 0 : index
    %c0_0 = arith.constant 0 : index
    %0 = vector.load %arg3[%c0, %c0_0] : memref<64x9xf32, #tpu.memory_space<vmem>>, vector<64x9xf32>
    %c0_1 = arith.constant 0 : index
    %c0_2 = arith.constant 0 : index
    %c0_3 = arith.constant 0 : index
    %1 = vector.load %arg2[%c0_1, %c0_2, %c0_3] : memref<1x9x256xf32, #tpu.memory_space<vmem>>, vector<1x9x256xf32>
    %2 = vector.shape_cast %1 : vector<1x9x256xf32> to vector<9x256xf32>
    %cst = arith.constant dense<0.000000e+00> : vector<64x256xf32>
    %3 = tpu.matmul %0, %2, %cst {dimension_numbers = #tpu.dot_dimension_numbers<[1], [0], [0], [1], [0, 0, 1, 1], [], []>} : vector<64x9xf32>, vector<9x256xf32>, vector<64x256xf32> -> vector<64x256xf32>
    %c0_4 = arith.constant 0 : index
    %c0_5 = arith.constant 0 : index
    %4 = vector.load %arg4[%c0_4, %c0_5] : memref<64x1xf32, #tpu.memory_space<vmem>>, vector<64x1xf32>
    %5 = vector.broadcast %4 : vector<64x1xf32> to vector<64x256xf32>
    %6 = arith.mulf %3, %5 : vector<64x256xf32>
    %c0_6 = arith.constant 0 : index
    %c0_7 = arith.constant 0 : index
    %7 = vector.load %arg5[%c0_6, %c0_7] : memref<64x1xf32, #tpu.memory_space<vmem>>, vector<64x1xf32>
    %8 = vector.broadcast %7 : vector<64x1xf32> to vector<64x256xf32>
    %9 = arith.addf %6, %8 : vector<64x256xf32>
    %cst_8 = arith.constant 0.000000e+00 : f32
    %10 = vector.broadcast %cst_8 : f32 to vector<64x256xf32>
    %11 = arith.maximumf %9, %10 : vector<64x256xf32>
    %c0_9 = arith.constant 0 : index
    %c0_10 = arith.constant 0 : index
    %c0_11 = arith.constant 0 : index
    %12 = vector.load %arg6[%c0_9, %c0_10, %c0_11] : memref<1x64x256xf32, #tpu.memory_space<vmem>>, vector<1x64x256xf32>
    %13 = vector.shape_cast %12 : vector<1x64x256xf32> to vector<64x256xf32>
    %14 = vector.shape_cast %11 : vector<64x256xf32> to vector<1x64x256xf32>
    tpu.vector_store %arg6[%c0_9, %c0_10, %c0_11], %14 {strides = array<i32>} : memref<1x64x256xf32, #tpu.memory_space<vmem>>, vector<1x64x256xf32>,
    return
  }
  func.func @transform_0(%arg0: i32, %arg1: i32) -> (i32, i32, i32) {
    %c0_i32 = arith.constant 0 : i32
    %c0_i32_0 = arith.constant 0 : i32
    return %arg0, %c0_i32, %arg1 : i32, i32, i32
  }
  func.func @transform_1(%arg0: i32, %arg1: i32) -> (i32, i32) {
    %c0_i32 = arith.constant 0 : i32
    %c0_i32_0 = arith.constant 0 : i32
    %c0_i32_1 = arith.constant 0 : i32
    return %c0_i32, %c0_i32_0 : i32, i32
  }
  func.func @transform_2(%arg0: i32, %arg1: i32) -> (i32, i32) {
    %c0_i32 = arith.constant 0 : i32
    %c0_i32_0 = arith.constant 0 : i32
    %c0_i32_1 = arith.constant 0 : i32
    return %c0_i32, %c0_i32_0 : i32, i32
  }
  func.func @transform_3(%arg0: i32, %arg1: i32) -> (i32, i32) {
    %c0_i32 = arith.constant 0 : i32
    %c0_i32_0 = arith.constant 0 : i32
    %c0_i32_1 = arith.constant 0 : i32
    return %c0_i32, %c0_i32_0 : i32, i32
  }
  func.func @transform_4(%arg0: i32, %arg1: i32) -> (i32, i32, i32) {
    %c0_i32 = arith.constant 0 : i32
    %c0_i32_0 = arith.constant 0 : i32
    return %arg0, %c0_i32, %arg1 : i32, i32, i32
  }
}

module attributes {stable_mosaic.version = 11 : i64} {
  func.func @_fused_conv_kernel(%arg0: i32, %arg1: i32, %arg2: memref<1x576x256xf32, #tpu.memory_space<vmem>>, %arg3: memref<64x576xf32, #tpu.memory_space<vmem>>, %arg4: memref<64x1xf32, #tpu.memory_space<vmem>>, %arg5: memref<64x1xf32, #tpu.memory_space<vmem>>, %arg6: memref<1x64x256xf32, #tpu.memory_space<vmem>>) attributes {dimension_semantics = [#tpu.dimension_semantics<parallel>, #tpu.dimension_semantics<parallel>], iteration_bounds = array<i64: 2, 1>, scalar_prefetch = 0 : i64, scratch_operands = 0 : i64, tpu.core_type = #tpu.core_type<tc>, window_params = [{transform_indices = @transform_0, window_bounds = array<i64: 1, 576, 256>}, {pipeline_mode = #tpu.pipeline_mode<synchronous>, transform_indices = @transform_1, window_bounds = array<i64: 64, 576>}, {pipeline_mode = #tpu.pipeline_mode<synchronous>, transform_indices = @transform_2, window_bounds = array<i64: 64, 1>}, {pipeline_mode = #tpu.pipeline_mode<synchronous>, transform_indices = @transform_3, window_bounds = array<i64: 64, 1>}, {transform_indices = @transform_4, window_bounds = array<i64: 1, 64, 256>}]} {
    %c0 = arith.constant 0 : index
    %c0_0 = arith.constant 0 : index
    %0 = vector.load %arg3[%c0, %c0_0] : memref<64x576xf32, #tpu.memory_space<vmem>>, vector<64x576xf32>
    %c0_1 = arith.constant 0 : index
    %c0_2 = arith.constant 0 : index
    %c0_3 = arith.constant 0 : index
    %1 = vector.load %arg2[%c0_1, %c0_2, %c0_3] : memref<1x576x256xf32, #tpu.memory_space<vmem>>, vector<1x576x256xf32>
    %2 = vector.shape_cast %1 : vector<1x576x256xf32> to vector<576x256xf32>
    %cst = arith.constant dense<0.000000e+00> : vector<64x256xf32>
    %3 = tpu.matmul %0, %2, %cst {dimension_numbers = #tpu.dot_dimension_numbers<[1], [0], [0], [1], [0, 0, 1, 1], [], []>} : vector<64x576xf32>, vector<576x256xf32>, vector<64x256xf32> -> vector<64x256xf32>
    %c0_4 = arith.constant 0 : index
    %c0_5 = arith.constant 0 : index
    %4 = vector.load %arg4[%c0_4, %c0_5] : memref<64x1xf32, #tpu.memory_space<vmem>>, vector<64x1xf32>
    %5 = vector.broadcast %4 : vector<64x1xf32> to vector<64x256xf32>
    %6 = arith.mulf %3, %5 : vector<64x256xf32>
    %c0_6 = arith.constant 0 : index
    %c0_7 = arith.constant 0 : index
    %7 = vector.load %arg5[%c0_6, %c0_7] : memref<64x1xf32, #tpu.memory_space<vmem>>, vector<64x1xf32>
    %8 = vector.broadcast %7 : vector<64x1xf32> to vector<64x256xf32>
    %9 = arith.addf %6, %8 : vector<64x256xf32>
    %cst_8 = arith.constant 0.000000e+00 : f32
    %10 = vector.broadcast %cst_8 : f32 to vector<64x256xf32>
    %11 = arith.maximumf %9, %10 : vector<64x256xf32>
    %c0_9 = arith.constant 0 : index
    %c0_10 = arith.constant 0 : index
    %c0_11 = arith.constant 0 : index
    %12 = vector.load %arg6[%c0_9, %c0_10, %c0_11] : memref<1x64x256xf32, #tpu.memory_space<vmem>>, vector<1x64x256xf32>
    %13 = vector.shape_cast %12 : vector<1x64x256xf32> to vector<64x256xf32>
    %14 = vector.shape_cast %11 : vector<64x256xf32> to vector<1x64x256xf32>
    tpu.vector_store %arg6[%c0_9, %c0_10, %c0_11], %14 {strides = array<i32>} : memref<1x64x256xf32, #tpu.memory_space<vmem>>, vector<1x64x256xf32>,
    return
  }
  func.func @transform_0(%arg0: i32, %arg1: i32) -> (i32, i32, i32) {
    %c0_i32 = arith.constant 0 : i32
    %c0_i32_0 = arith.constant 0 : i32
    return %arg0, %c0_i32, %arg1 : i32, i32, i32
  }
  func.func @transform_1(%arg0: i32, %arg1: i32) -> (i32, i32) {
    %c0_i32 = arith.constant 0 : i32
    %c0_i32_0 = arith.constant 0 : i32
    %c0_i32_1 = arith.constant 0 : i32
    return %c0_i32, %c0_i32_0 : i32, i32
  }
  func.func @transform_2(%arg0: i32, %arg1: i32) -> (i32, i32) {
    %c0_i32 = arith.constant 0 : i32
    %c0_i32_0 = arith.constant 0 : i32
    %c0_i32_1 = arith.constant 0 : i32
    return %c0_i32, %c0_i32_0 : i32, i32
  }
  func.func @transform_3(%arg0: i32, %arg1: i32) -> (i32, i32) {
    %c0_i32 = arith.constant 0 : i32
    %c0_i32_0 = arith.constant 0 : i32
    %c0_i32_1 = arith.constant 0 : i32
    return %c0_i32, %c0_i32_0 : i32, i32
  }
  func.func @transform_4(%arg0: i32, %arg1: i32) -> (i32, i32, i32) {
    %c0_i32 = arith.constant 0 : i32
    %c0_i32_0 = arith.constant 0 : i32
    return %arg0, %c0_i32, %arg1 : i32, i32, i32
  }
}

module attributes {stable_mosaic.version = 11 : i64} {
  func.func @_fused_conv_kernel(%arg0: i32, %arg1: i32, %arg2: memref<1x576x256xf32, #tpu.memory_space<vmem>>, %arg3: memref<1x576xf32, #tpu.memory_space<vmem>>, %arg4: memref<1x1xf32, #tpu.memory_space<vmem>>, %arg5: memref<1x1xf32, #tpu.memory_space<vmem>>, %arg6: memref<1x1x256xf32, #tpu.memory_space<vmem>>) attributes {dimension_semantics = [#tpu.dimension_semantics<parallel>, #tpu.dimension_semantics<parallel>], iteration_bounds = array<i64: 2, 1>, scalar_prefetch = 0 : i64, scratch_operands = 0 : i64, tpu.core_type = #tpu.core_type<tc>, window_params = [{transform_indices = @transform_0, window_bounds = array<i64: 1, 576, 256>}, {pipeline_mode = #tpu.pipeline_mode<synchronous>, transform_indices = @transform_1, window_bounds = array<i64: 1, 576>}, {pipeline_mode = #tpu.pipeline_mode<synchronous>, transform_indices = @transform_2, window_bounds = array<i64: 1, 1>}, {pipeline_mode = #tpu.pipeline_mode<synchronous>, transform_indices = @transform_3, window_bounds = array<i64: 1, 1>}, {transform_indices = @transform_4, window_bounds = array<i64: 1, 1, 256>}]} {
    %c0 = arith.constant 0 : index
    %c0_0 = arith.constant 0 : index
    %0 = vector.load %arg3[%c0, %c0_0] : memref<1x576xf32, #tpu.memory_space<vmem>>, vector<1x576xf32>
    %c0_1 = arith.constant 0 : index
    %c0_2 = arith.constant 0 : index
    %c0_3 = arith.constant 0 : index
    %1 = vector.load %arg2[%c0_1, %c0_2, %c0_3] : memref<1x576x256xf32, #tpu.memory_space<vmem>>, vector<1x576x256xf32>
    %2 = vector.shape_cast %1 : vector<1x576x256xf32> to vector<576x256xf32>
    %cst = arith.constant dense<0.000000e+00> : vector<1x256xf32>
    %3 = tpu.matmul %0, %2, %cst {dimension_numbers = #tpu.dot_dimension_numbers<[1], [0], [0], [1], [0, 0, 1, 1], [], []>} : vector<1x576xf32>, vector<576x256xf32>, vector<1x256xf32> -> vector<1x256xf32>
    %c0_4 = arith.constant 0 : index
    %c0_5 = arith.constant 0 : index
    %4 = vector.load %arg4[%c0_4, %c0_5] : memref<1x1xf32, #tpu.memory_space<vmem>>, vector<1x1xf32>
    %5 = vector.broadcast %4 : vector<1x1xf32> to vector<1x256xf32>
    %6 = arith.mulf %3, %5 : vector<1x256xf32>
    %c0_6 = arith.constant 0 : index
    %c0_7 = arith.constant 0 : index
    %7 = vector.load %arg5[%c0_6, %c0_7] : memref<1x1xf32, #tpu.memory_space<vmem>>, vector<1x1xf32>
    %8 = vector.broadcast %7 : vector<1x1xf32> to vector<1x256xf32>
    %9 = arith.addf %6, %8 : vector<1x256xf32>
    %c0_8 = arith.constant 0 : index
    %c0_9 = arith.constant 0 : index
    %c0_10 = arith.constant 0 : index
    %10 = vector.load %arg6[%c0_8, %c0_9, %c0_10] : memref<1x1x256xf32, #tpu.memory_space<vmem>>, vector<1x1x256xf32>
    %11 = vector.shape_cast %10 : vector<1x1x256xf32> to vector<1x256xf32>
    %12 = vector.shape_cast %9 : vector<1x256xf32> to vector<1x1x256xf32>
    tpu.vector_store %arg6[%c0_8, %c0_9, %c0_10], %12 {strides = array<i32>} : memref<1x1x256xf32, #tpu.memory_space<vmem>>, vector<1x1x256xf32>,
    return
  }
  func.func @transform_0(%arg0: i32, %arg1: i32) -> (i32, i32, i32) {
    %c0_i32 = arith.constant 0 : i32
    %c0_i32_0 = arith.constant 0 : i32
    return %arg0, %c0_i32, %arg1 : i32, i32, i32
  }
  func.func @transform_1(%arg0: i32, %arg1: i32) -> (i32, i32) {
    %c0_i32 = arith.constant 0 : i32
    %c0_i32_0 = arith.constant 0 : i32
    %c0_i32_1 = arith.constant 0 : i32
    return %c0_i32, %c0_i32_0 : i32, i32
  }
  func.func @transform_2(%arg0: i32, %arg1: i32) -> (i32, i32) {
    %c0_i32 = arith.constant 0 : i32
    %c0_i32_0 = arith.constant 0 : i32
    %c0_i32_1 = arith.constant 0 : i32
    return %c0_i32, %c0_i32_0 : i32, i32
  }
  func.func @transform_3(%arg0: i32, %arg1: i32) -> (i32, i32) {
    %c0_i32 = arith.constant 0 : i32
    %c0_i32_0 = arith.constant 0 : i32
    %c0_i32_1 = arith.constant 0 : i32
    return %c0_i32, %c0_i32_0 : i32, i32
  }
  func.func @transform_4(%arg0: i32, %arg1: i32) -> (i32, i32, i32) {
    %c0_i32 = arith.constant 0 : i32
    %c0_i32_0 = arith.constant 0 : i32
    return %arg0, %c0_i32, %arg1 : i32, i32, i32
  }
}

</mosaic_0001>

<llo_original>
// kernel: forward.17
$region0: #{forward.17}
  #allocation0 [shape = 'u32[]', space=smem, size = 0x4, offset = 0x4, fixed_abs, tag = 'smem constant byte address 0x4 - core index']
  #allocation1 [shape = 'u32[144,128]{1,0:T(1,128)}', space=vmem, size = 0x12000, scoped, tag = 'internal scratch']
  %s0 = inlined_call_operand.vmem [shape: f32[2,9,256], index: 0, kind: input, shape index: {}]
  %s1 = inlined_call_operand.vmem [shape: f32[64,9], index: 1, kind: input, shape index: {}]
  %s2 = inlined_call_operand.vmem [shape: f32[64,1], index: 2, kind: input, shape index: {}]
  %s3 = inlined_call_operand.vmem [shape: f32[64,1], index: 3, kind: input, shape index: {}]
  %s4 = inlined_call_operand.vmem [shape: f32[2,64,256], index: 4, kind: output, shape index: {}]
  %s5 = sld [smem:[#allocation0]]
  $region49: #{forward.17} parent=0
    _
  %s7 = ssub.s32 1, %s5
  %s8 = scalar_select 0, %s7, %s5
  loop: start=0, step=1, limit=4
  $region2: #{forward.17} parent=0 // loop_pre_header
    _
  $region3: #{forward.17} parent=0 // loop_header
    %s10 = sphi 0, %s14
    %p11 = scmp.ge.s32.totalorder %s10, 4
    %s17 = sphi 0, %s29
    %s18 = sphi 0, %s25
    %s19 = sphi 0, %s17
    %s20 = sphi 0, %s18
    %s21 = sphi 0, %s19
    %s22 = sphi 0, %s20
    %s34 = sphi 0, %s36
    %s37 = sphi 0, %s34
    %s38 = sphi 0, %s37
    %s54 = sphi 0, %s38
    %s58 = sphi 0, %s58
    %s60 = sphi 0, %s58
    %s61 = sphi 0, %s60
    %s75 = sphi 0, %s61
    %s79 = sphi 0, %s79
    %s81 = sphi 0, %s79
    %s82 = sphi 0, %s81
    %s96 = sphi 0, %s82
    %s100 = sphi 0, %s100
    %s102 = sphi 0, %s100
    %s103 = sphi 0, %s102
    %s117 = sphi 0, %s103
    %s125 = sphi 0, %s127
    %s128 = sphi 0, %s125
    %s129 = sphi 0, %s128
    %s145 = sphi 0, %s129
  $region4: #{forward.17} parent=0 // loop_header_branch
    %13 = sbr.rel (%p11) target = $region8
  $region5: #{forward.17} parent=0 // loop_body
    %s15 = ssub.s32 %s10, 1
    %s16 = ssub.s32 %s10, 2
    %s23 = sadd.s32 1, %s18
    %p24 = scmp.ge.s32.totalorder %s23, 1
    %s25 = scalar_select %p24, 0, %s23
    %s26 = sadd.s32 1, %s17
    %s27 = scalar_select %p24, %s26, %s17
    %p28 = scmp.ge.s32.totalorder %s27, 2
    %s29 = scalar_select %p28, 0, %s27
    %s30 = ssub.s32 %s17, %s29
    %s31 = ssub.s32 %s18, %s25
    %s32 = sor.u32 %s30, %s31
    %p33 = scmp.eq.s32.totalorder %s32, 0
    %s35 = sadd.s32 %s34, 1
    %s36 = scalar_select %p33, %s34, %s35
    %p39 = pneg %p33
    %p40 = scmp.eq.s32.totalorder %s10, 1
    %p41 = por %p39, %p40
    %p42 = scmp.ne.s32.totalorder %s34, %s37
    %p43 = scmp.eq.s32.totalorder %s10, 0
    %p44 = por %p42, %p43
    %p45 = scmp.ne.s32.totalorder %s34, %s37
    %p46 = scmp.eq.s32.totalorder %s15, 1
    %p47 = por %p45, %p46
    %p48 = scmp.ne.s32.totalorder %s37, %s38
    %p49 = scmp.eq.s32.totalorder %s15, 0
    %p50 = por %p48, %p49
    %p51 = scmp.ne.s32.totalorder %s37, %s38
    %p52 = scmp.eq.s32.totalorder %s16, 1
    %p53 = por %p51, %p52
    %p55 = scmp.ne.s32.totalorder %s38, %s54
    %p56 = scmp.eq.s32.totalorder %s16, 0
    %p57 = por %p55, %p56
    %s59 = sadd.s32 %s58, 1
    %p62 = scmp.eq.s32.totalorder %s10, 1
    %p63 = scmp.ne.s32.totalorder %s58, %s60
    %p64 = scmp.eq.s32.totalorder %s10, 0
    %p65 = por %p63, %p64
    %p66 = scmp.ne.s32.totalorder %s58, %s60
    %p67 = scmp.eq.s32.totalorder %s15, 1
    %p68 = por %p66, %p67
    %p69 = scmp.ne.s32.totalorder %s60, %s61
    %p70 = scmp.eq.s32.totalorder %s15, 0
    %p71 = por %p69, %p70
    %p72 = scmp.ne.s32.totalorder %s60, %s61
    %p73 = scmp.eq.s32.totalorder %s16, 1
    %p74 = por %p72, %p73
    %p76 = scmp.ne.s32.totalorder %s61, %s75
    %p77 = scmp.eq.s32.totalorder %s16, 0
    %p78 = por %p76, %p77
    %s80 = sadd.s32 %s79, 1
    %p83 = scmp.eq.s32.totalorder %s10, 1
    %p84 = scmp.ne.s32.totalorder %s79, %s81
    %p85 = scmp.eq.s32.totalorder %s10, 0
    %p86 = por %p84, %p85
    %p87 = scmp.ne.s32.totalorder %s79, %s81
    %p88 = scmp.eq.s32.totalorder %s15, 1
    %p89 = por %p87, %p88
    %p90 = scmp.ne.s32.totalorder %s81, %s82
    %p91 = scmp.eq.s32.totalorder %s15, 0
    %p92 = por %p90, %p91
    %p93 = scmp.ne.s32.totalorder %s81, %s82
    %p94 = scmp.eq.s32.totalorder %s16, 1
    %p95 = por %p93, %p94
    %p97 = scmp.ne.s32.totalorder %s82, %s96
    %p98 = scmp.eq.s32.totalorder %s16, 0
    %p99 = por %p97, %p98
    %s101 = sadd.s32 %s100, 1
    %p104 = scmp.eq.s32.totalorder %s10, 1
    %p105 = scmp.ne.s32.totalorder %s100, %s102
    %p106 = scmp.eq.s32.totalorder %s10, 0
    %p107 = por %p105, %p106
    %p108 = scmp.ne.s32.totalorder %s100, %s102
    %p109 = scmp.eq.s32.totalorder %s15, 1
    %p110 = por %p108, %p109
    %p111 = scmp.ne.s32.totalorder %s102, %s103
    %p112 = scmp.eq.s32.totalorder %s15, 0
    %p113 = por %p111, %p112
    %p114 = scmp.ne.s32.totalorder %s102, %s103
    %p115 = scmp.eq.s32.totalorder %s16, 1
    %p116 = por %p114, %p115
    %p118 = scmp.ne.s32.totalorder %s103, %s117
    %p119 = scmp.eq.s32.totalorder %s16, 0
    %p120 = por %p118, %p119
    %s121 = ssub.s32 %s17, %s29
    %s122 = ssub.s32 %s18, %s25
    %s123 = sor.u32 %s121, %s122
    %p124 = scmp.eq.s32.totalorder %s123, 0
    %s126 = sadd.s32 %s125, 1
    %s127 = scalar_select %p124, %s125, %s126
    %p130 = pneg %p124
    %p131 = scmp.eq.s32.totalorder %s10, 1
    %p132 = por %p130, %p131
    %p133 = scmp.ne.s32.totalorder %s125, %s128
    %p134 = scmp.eq.s32.totalorder %s10, 0
    %p135 = por %p133, %p134
    %p136 = scmp.ne.s32.totalorder %s125, %s128
    %p137 = scmp.eq.s32.totalorder %s15, 1
    %p138 = por %p136, %p137
    %p139 = scmp.ne.s32.totalorder %s128, %s129
    %p140 = scmp.eq.s32.totalorder %s15, 0
    %p141 = por %p139, %p140
    %p142 = scmp.ne.s32.totalorder %s128, %s129
    %p143 = scmp.eq.s32.totalorder %s16, 1
    %p144 = por %p142, %p143
    %p146 = scmp.ne.s32.totalorder %s129, %s145
    %p147 = scmp.eq.s32.totalorder %s16, 0
    %p148 = por %p146, %p147
    %p149 = scmp.le.s32.totalorder 1, %s10
    %p150 = scmp.lt.s32.totalorder %s10, 3
    %p151 = pnand %p149, %p150
    %p152 = pneg %p151
    // Predicated region
    $region9: #{forward.17} parent=5 // pred_check
      _
    $region10: #{forward.17} parent=5 // pred_check_branch
      %154 = sbr.rel (%p151) target = $region12
    $region11: #{forward.17} parent=5 // pred_region
      %s155 = ssub.s32 %s10, 1
      // Predicated region
      $region13: #{forward.17} parent=11 // pred_check
        %p156 = pneg %p71
      $region14: #{forward.17} parent=11 // pred_check_branch
        %158 = sbr.rel (%p156) target = $region16
      $region15: #{forward.17} parent=11 // pred_region
        _
      $region16: #{forward.17} parent=11 // pred_fallthru
        _
      // Predicated region
      $region17: #{forward.17} parent=11 // pred_check
        %p159 = pneg %p92
      $region18: #{forward.17} parent=11 // pred_check_branch
        %161 = sbr.rel (%p159) target = $region20
      $region19: #{forward.17} parent=11 // pred_region
        _
      $region20: #{forward.17} parent=11 // pred_fallthru
        _
      // Predicated region
      $region21: #{forward.17} parent=11 // pred_check
        %p162 = pneg %p113
      $region22: #{forward.17} parent=11 // pred_check_branch
        %164 = sbr.rel (%p162) target = $region24
      $region23: #{forward.17} parent=11 // pred_region
        _
      $region24: #{forward.17} parent=11 // pred_fallthru
        _
    $region12: #{forward.17} parent=5 // pred_fallthru
      _
    %p165 = scmp.lt.s32.totalorder %s10, 2
    // Predicated region
    $region25: #{forward.17} parent=5 // pred_check
      %p166 = pneg %p165
    $region26: #{forward.17} parent=5 // pred_check_branch
      %168 = sbr.rel (%p166) target = $region28
    $region27: #{forward.17} parent=5 // pred_region
      // Predicated region
      $region29: #{forward.17} parent=27 // pred_check
        %p169 = pneg %p44
      $region30: #{forward.17} parent=27 // pred_check_branch
        %171 = sbr.rel (%p169) target = $region32
      $region31: #{forward.17} parent=27 // pred_region
        %s172 = smul.u32 2, %s18
        %p173 = scmp.lt.s32.totalorder %s17, 1
        %s174 = scalar_select %p173, %s17, 1
        %p175 = scmp.lt.s32.totalorder %s172, 1
        %s176 = scalar_select %p175, %s172, 1
        %s177 = smul.addr %s174, 4
        %s178 = sadd.s32 %s176, %s177
        %s179 = smul.addr %s178, 8
        %s180 = scalar_lea.vmem %s0, %s179
        %s181 = smul.u32 2, %s18
      $region32: #{forward.17} parent=27 // pred_fallthru
        _
    $region28: #{forward.17} parent=5 // pred_fallthru
      _
    %p182 = scmp.le.s32.totalorder 1, %s10
    %p183 = scmp.lt.s32.totalorder %s10, 3
    %p184 = pnand %p182, %p183
    %p185 = pneg %p184
    // Predicated region
    $region33: #{forward.17} parent=5 // pred_check
      _
    $region34: #{forward.17} parent=5 // pred_check_branch
      %187 = sbr.rel (%p184) target = $region36
    $region35: #{forward.17} parent=5 // pred_region
      %s188 = ssub.s32 %s10, 1
      %s189 = smul.u32 2, %s20
      %p190 = scmp.lt.s32.totalorder %s19, 1
      %s191 = scalar_select %p190, %s19, 1
      %p192 = scmp.lt.s32.totalorder %s189, 1
      %s193 = scalar_select %p192, %s189, 1
      %s194 = smul.addr %s191, 4
      %s195 = sadd.s32 %s193, %s194
      %s196 = smul.addr %s195, 8
      %s197 = scalar_lea.vmem %s0, %s196
      %p198 = pneg %p50
      %p199 = pneg %p47
      %p200 = pneg %p71
      %p201 = pneg %p68
      %p202 = pneg %p92
      %p203 = pneg %p89
      %p204 = pneg %p113
      %p205 = pneg %p110
      %p206 = pneg %p141
      %p207 = pneg %p138
      %s208 = smul.u32 2, %s20
      %p209 = scmp.lt.s32.totalorder %s19, 1
      %s210 = scalar_select %p209, %s19, 1
      %p211 = scmp.lt.s32.totalorder %s208, 1
      %s212 = scalar_select %p211, %s208, 1
      %s213 = smul.addr %s210, 16
      %s214 = sadd.s32 %s212, %s213
      %s215 = smul.addr %s214, 8
      %s216 = scalar_lea.vmem %s4, %s215
      %s217 = smul.u32 2, %s20
      %p218 = scmp.lt.s32.totalorder %s19, 1
      %s219 = scalar_select %p218, %s19, 1
      %p220 = scmp.lt.s32.totalorder %s217, 1
      %s221 = scalar_select %p220, %s217, 1
      %s222 = smul.addr %s219, 4
      %s223 = sadd.s32 %s221, %s222
      %s224 = smul.addr %s223, 8
      %s225 = scalar_lea.vmem %s0, %s224
      %s226 = smul.u32 2, %s20
      %s227 = smul.u32 2, %s20
      %p228 = scmp.lt.s32.totalorder %s19, 1
      %s229 = scalar_select %p228, %s19, 1
      %p230 = scmp.lt.s32.totalorder %s227, 1
      %s231 = scalar_select %p230, %s227, 1
      %s232 = smul.addr %s229, 16
      %s233 = sadd.s32 %s231, %s232
      %s234 = smul.addr %s233, 8
      %s235 = scalar_lea.vmem %s4, %s234
      %s236 = smul.u32 2, %s20
      %v237 = vld [vmem:[%s1] sm:$0xff]
      %v238 = vld [vmem:[%s1 + $0x8] sm:$0xff]
      %v239 = vld [vmem:[%s1 + $0x10] sm:$0xff]
      %v240 = vld [vmem:[%s1 + $0x18] sm:$0xff]
      %v241 = vld [vmem:[%s1 + $0x20] sm:$0xff]
      %v242 = vld [vmem:[%s1 + $0x28] sm:$0xff]
      %v243 = vld [vmem:[%s1 + $0x30] sm:$0xff]
      %v244 = vld [vmem:[%s1 + $0x38] sm:$0xff]
      %v245 = vld [vmem:[%s225] sm:$0xff]
      %v246 = vld [vmem:[%s225 + $0x8] sm:$0xff]
      %v247 = vld [vmem:[%s225 + $0x10] sm:$0x1]
      %v248 = vld [vmem:[%s225 + $0x18] sm:$0x1]
      %vm249 = vcmask 72704
      %v251 = vsel %vm249, %v237, 0
      %v254 = vsel %vm249, %v238, 0
      %v257 = vsel %vm249, %v239, 0
      %v260 = vsel %vm249, %v240, 0
      %v263 = vsel %vm249, %v241, 0
      %v266 = vsel %vm249, %v242, 0
      %v269 = vsel %vm249, %v243, 0
      %v272 = vsel %vm249, %v244, 0
      %vm274 = vcmask 1040384
      %v276 = vsel %vm274, %v247, 0
      %v279 = vsel %vm274, %v248, 0
      %281 = vmatprep.subr.mxu0 %v246
      %282 = vmatpush1.msra.mxu0 %v245
      %283 = vmatprep.subr.mxu0 %v279
      %284 = vmatpush1.msra.mxu0 %v276
      %285 = vmatprep.subr.mxu0 0.0
      %286 = vmatpush1.msra.mxu0 0.0
      %287 = vmatprep.subr.mxu0 0.0
      %288 = vmatpush1.msra.mxu0 0.0
      %289 = vmatprep.subr.mxu0 0.0
      %290 = vmatpush1.msra.mxu0 0.0
      %291 = vmatprep.subr.mxu0 0.0
      %292 = vmatpush1.msra.mxu0 0.0
      %293 = vmatprep.subr.mxu0 0.0
      %294 = vmatpush1.msra.mxu0 0.0
      %295 = vmatprep.subr.mxu0 0.0
      %296 = vmatpush1.msra.mxu0 0.0
      %297 = vmatprep.subr.mxu0 0.0
      %298 = vmatpush1.msra.mxu0 0.0
      %299 = vmatprep.subr.mxu0 0.0
      %300 = vmatpush1.msra.mxu0 0.0
      %301 = vmatprep.subr.mxu0 0.0
      %302 = vmatpush1.msra.mxu0 0.0
      %303 = vmatprep.subr.mxu0 0.0
      %304 = vmatpush1.msra.mxu0 0.0
      %305 = vmatprep.subr.mxu0 0.0
      %306 = vmatpush1.msra.mxu0 0.0
      %307 = vmatprep.subr.mxu0 0.0
      %308 = vmatpush1.msra.mxu0 0.0
      %309 = vmatprep.subr.mxu0 0.0
      %310 = vmatpush1.msra.mxu0 0.0
      %311 = vmatprep.subr.mxu0 0.0
      %312 = vmatpush1.msra.mxu0 0.0
      %313 = vmatprep.subr.mxu0 0.0
      %314 = vmatpush1.msra.mxu0 0.0
      %315 = vmatprep.subr.mxu0 0.0
      %316 = vmatpush1.msra.mxu0 0.0
      %317 = vmatprep.subr.mxu0 0.0
      %318 = vmatpush1.msra.mxu0 0.0
      %319 = vmatprep.subr.mxu0 0.0
      %320 = vmatpush1.msra.mxu0 0.0
      %321 = vmatprep.subr.mxu0 0.0
      %322 = vmatpush1.msra.mxu0 0.0
      %323 = vmatprep.subr.mxu0 0.0
      %324 = vmatpush1.msra.mxu0 0.0
      %325 = vmatprep.subr.mxu0 0.0
      %326 = vmatpush1.msra.mxu0 0.0
      %327 = vmatprep.subr.mxu0 0.0
      %328 = vmatpush1.msra.mxu0 0.0
      %329 = vmatprep.subr.mxu0 0.0
      %330 = vmatpush1.msra.mxu0 0.0
      %331 = vmatprep.subr.mxu0 0.0
      %332 = vmatpush1.msra.mxu0 0.0
      %333 = vmatprep.subr.mxu0 0.0
      %334 = vmatpush1.msra.mxu0 0.0
      %335 = vmatprep.subr.mxu0 0.0
      %336 = vmatpush1.msra.mxu0 0.0
      %337 = vmatprep.subr.mxu0 0.0
      %338 = vmatpush1.msra.mxu0 0.0
      %339 = vmatprep.subr.mxu0 0.0
      %340 = vmatpush1.msra.mxu0 0.0
      %341 = vmatprep.subr.mxu0 0.0
      %342 = vmatpush1.msra.mxu0 0.0
      %343 = vmatprep.subr.mxu0 0.0
      %344 = vmatpush1.msra.mxu0 0.0
      %345 = vmatprep.mubr.f32.mxu0 0.0
      %346 = vmatmul.mubr.f32.gmra.mrb[0].mxu0 %v251
      %v347 = vpop.f32.mrb[0].mxu0
      %v348 = vadd.f32 0.0, %v347
      %v349 = vpop.f32.mrb[0].mxu0
      %v350 = vadd.f32 0.0, %v349
      %351 = vmatprep.mubr.f32.mxu0 0.0
      %352 = vmatmul.mubr.f32.gmra.mrb[0].mxu0 %v254
      %v353 = vpop.f32.mrb[0].mxu0
      %v354 = vadd.f32 0.0, %v353
      %v355 = vpop.f32.mrb[0].mxu0
      %v356 = vadd.f32 0.0, %v355
      %357 = vmatprep.mubr.f32.mxu0 0.0
      %358 = vmatmul.mubr.f32.gmra.mrb[0].mxu0 %v257
      %v359 = vpop.f32.mrb[0].mxu0
      %v360 = vadd.f32 0.0, %v359
      %v361 = vpop.f32.mrb[0].mxu0
      %v362 = vadd.f32 0.0, %v361
      %363 = vmatprep.mubr.f32.mxu0 0.0
      %364 = vmatmul.mubr.f32.gmra.mrb[0].mxu0 %v260
      %v365 = vpop.f32.mrb[0].mxu0
      %v366 = vadd.f32 0.0, %v365
      %v367 = vpop.f32.mrb[0].mxu0
      %v368 = vadd.f32 0.0, %v367
      %369 = vmatprep.mubr.f32.mxu0 0.0
      %370 = vmatmul.mubr.f32.gmra.mrb[0].mxu0 %v263
      %v371 = vpop.f32.mrb[0].mxu0
      %v372 = vadd.f32 0.0, %v371
      %v373 = vpop.f32.mrb[0].mxu0
      %v374 = vadd.f32 0.0, %v373
      %375 = vmatprep.mubr.f32.mxu0 0.0
      %376 = vmatmul.mubr.f32.gmra.mrb[0].mxu0 %v266
      %v377 = vpop.f32.mrb[0].mxu0
      %v378 = vadd.f32 0.0, %v377
      %v379 = vpop.f32.mrb[0].mxu0
      %v380 = vadd.f32 0.0, %v379
      %381 = vmatprep.mubr.f32.mxu0 0.0
      %382 = vmatmul.mubr.f32.gmra.mrb[0].mxu0 %v269
      %v383 = vpop.f32.mrb[0].mxu0
      %v384 = vadd.f32 0.0, %v383
      %v385 = vpop.f32.mrb[0].mxu0
      %v386 = vadd.f32 0.0, %v385
      %387 = vmatprep.mubr.f32.mxu0 0.0
      %388 = vmatmul.mubr.f32.gmra.mrb[0].mxu0 %v272
      %v389 = vpop.f32.mrb[0].mxu0
      %v390 = vadd.f32 0.0, %v389
      %v391 = vpop.f32.mrb[0].mxu0
      %v392 = vadd.f32 0.0, %v391
      %393 = vdwg.mxu0
      %v394 = vld [vmem:[%s2] sm:$0xff]
      %v395 = vld [vmem:[%s2 + $0x8] sm:$0xff]
      %v396 = vld [vmem:[%s2 + $0x10] sm:$0xff]
      %v397 = vld [vmem:[%s2 + $0x18] sm:$0xff]
      %v398 = vld [vmem:[%s2 + $0x20] sm:$0xff]
      %v399 = vld [vmem:[%s2 + $0x28] sm:$0xff]
      %v400 = vld [vmem:[%s2 + $0x30] sm:$0xff]
      %v401 = vld [vmem:[%s2 + $0x38] sm:$0xff]
      %403 = vset.pattern.permute.xlu0 0
      %404 = vperm.xlu0 %403, %v394
      %v405 = vpop.permute.xlu0 %404
      %408 = vset.pattern.permute.xlu0 0
      %409 = vperm.xlu0 %408, %v395
      %v410 = vpop.permute.xlu0 %409
      %413 = vset.pattern.permute.xlu0 0
      %414 = vperm.xlu0 %413, %v396
      %v415 = vpop.permute.xlu0 %414
      %418 = vset.pattern.permute.xlu0 0
      %419 = vperm.xlu0 %418, %v397
      %v420 = vpop.permute.xlu0 %419
      %423 = vset.pattern.permute.xlu0 0
      %424 = vperm.xlu0 %423, %v398
      %v425 = vpop.permute.xlu0 %424
      %428 = vset.pattern.permute.xlu0 0
      %429 = vperm.xlu0 %428, %v399
      %v430 = vpop.permute.xlu0 %429
      %433 = vset.pattern.permute.xlu0 0
      %434 = vperm.xlu0 %433, %v400
      %v435 = vpop.permute.xlu0 %434
      %438 = vset.pattern.permute.xlu0 0
      %439 = vperm.xlu0 %438, %v401
      %v440 = vpop.permute.xlu0 %439
      %v442 = vmul.f32 %v348, %v405
      %v443 = vmul.f32 %v350, %v405
      %v444 = vmul.f32 %v354, %v410
      %v445 = vmul.f32 %v356, %v410
      %v446 = vmul.f32 %v360, %v415
      %v447 = vmul.f32 %v362, %v415
      %v448 = vmul.f32 %v366, %v420
      %v449 = vmul.f32 %v368, %v420
      %v450 = vmul.f32 %v372, %v425
      %v451 = vmul.f32 %v374, %v425
      %v452 = vmul.f32 %v378, %v430
      %v453 = vmul.f32 %v380, %v430
      %v454 = vmul.f32 %v384, %v435
      %v455 = vmul.f32 %v386, %v435
      %v456 = vmul.f32 %v390, %v440
      %v457 = vmul.f32 %v392, %v440
      %v458 = vld [vmem:[%s3] sm:$0xff]
      %v459 = vld [vmem:[%s3 + $0x8] sm:$0xff]
      %v460 = vld [vmem:[%s3 + $0x10] sm:$0xff]
      %v461 = vld [vmem:[%s3 + $0x18] sm:$0xff]
      %v462 = vld [vmem:[%s3 + $0x20] sm:$0xff]
      %v463 = vld [vmem:[%s3 + $0x28] sm:$0xff]
      %v464 = vld [vmem:[%s3 + $0x30] sm:$0xff]
      %v465 = vld [vmem:[%s3 + $0x38] sm:$0xff]
      %467 = vset.pattern.permute.xlu0 0
      %468 = vperm.xlu0 %467, %v458
      %v469 = vpop.permute.xlu0 %468
      %472 = vset.pattern.permute.xlu0 0
      %473 = vperm.xlu0 %472, %v459
      %v474 = vpop.permute.xlu0 %473
      %477 = vset.pattern.permute.xlu0 0
      %478 = vperm.xlu0 %477, %v460
      %v479 = vpop.permute.xlu0 %478
      %482 = vset.pattern.permute.xlu0 0
      %483 = vperm.xlu0 %482, %v461
      %v484 = vpop.permute.xlu0 %483
      %487 = vset.pattern.permute.xlu0 0
      %488 = vperm.xlu0 %487, %v462
      %v489 = vpop.permute.xlu0 %488
      %492 = vset.pattern.permute.xlu0 0
      %493 = vperm.xlu0 %492, %v463
      %v494 = vpop.permute.xlu0 %493
      %497 = vset.pattern.permute.xlu0 0
      %498 = vperm.xlu0 %497, %v464
      %v499 = vpop.permute.xlu0 %498
      %502 = vset.pattern.permute.xlu0 0
      %503 = vperm.xlu0 %502, %v465
      %v504 = vpop.permute.xlu0 %503
      %v506 = vadd.f32 %v442, %v469
      %v507 = vadd.f32 %v443, %v469
      %v508 = vadd.f32 %v444, %v474
      %v509 = vadd.f32 %v445, %v474
      %v510 = vadd.f32 %v446, %v479
      %v511 = vadd.f32 %v447, %v479
      %v512 = vadd.f32 %v448, %v484
      %v513 = vadd.f32 %v449, %v484
      %v514 = vadd.f32 %v450, %v489
      %v515 = vadd.f32 %v451, %v489
      %v516 = vadd.f32 %v452, %v494
      %v517 = vadd.f32 %v453, %v494
      %v518 = vadd.f32 %v454, %v499
      %v519 = vadd.f32 %v455, %v499
      %v520 = vadd.f32 %v456, %v504
      %v521 = vadd.f32 %v457, %v504
      %v522 = vmax.f32 %v506, 0.0
      %v523 = vmax.f32 %v507, 0.0
      %v524 = vmax.f32 %v508, 0.0
      %v525 = vmax.f32 %v509, 0.0
      %v526 = vmax.f32 %v510, 0.0
      %v527 = vmax.f32 %v511, 0.0
      %v528 = vmax.f32 %v512, 0.0
      %v529 = vmax.f32 %v513, 0.0
      %v530 = vmax.f32 %v514, 0.0
      %v531 = vmax.f32 %v515, 0.0
      %v532 = vmax.f32 %v516, 0.0
      %v533 = vmax.f32 %v517, 0.0
      %v534 = vmax.f32 %v518, 0.0
      %v535 = vmax.f32 %v519, 0.0
      %v536 = vmax.f32 %v520, 0.0
      %v537 = vmax.f32 %v521, 0.0
      %538 = vst [vmem:[%s235] sm:$0xff] %v522
      %539 = vst [vmem:[%s235 + $0x8] sm:$0xff] %v523
      %540 = vst [vmem:[%s235 + $0x10] sm:$0xff] %v524
      %541 = vst [vmem:[%s235 + $0x18] sm:$0xff] %v525
      %542 = vst [vmem:[%s235 + $0x20] sm:$0xff] %v526
      %543 = vst [vmem:[%s235 + $0x28] sm:$0xff] %v527
      %544 = vst [vmem:[%s235 + $0x30] sm:$0xff] %v528
      %545 = vst [vmem:[%s235 + $0x38] sm:$0xff] %v529
      %546 = vst [vmem:[%s235 + $0x40] sm:$0xff] %v530
      %547 = vst [vmem:[%s235 + $0x48] sm:$0xff] %v531
      %548 = vst [vmem:[%s235 + $0x50] sm:$0xff] %v532
      %549 = vst [vmem:[%s235 + $0x58] sm:$0xff] %v533
      %550 = vst [vmem:[%s235 + $0x60] sm:$0xff] %v534
      %551 = vst [vmem:[%s235 + $0x68] sm:$0xff] %v535
      %552 = vst [vmem:[%s235 + $0x70] sm:$0xff] %v536
      %553 = vst [vmem:[%s235 + $0x78] sm:$0xff] %v537
      %s554 = smul.u32 2, %s20
      %p555 = scmp.lt.s32.totalorder %s19, 1
      %s556 = scalar_select %p555, %s19, 1
      %p557 = scmp.lt.s32.totalorder %s554, 1
      %s558 = scalar_select %p557, %s554, 1
      %s559 = smul.addr %s556, 16
      %s560 = sadd.s32 %s558, %s559
      %s561 = smul.addr %s560, 8
      %s562 = scalar_lea.vmem %s4, %s561
      // Predicated region
      $region37: #{forward.17} parent=35 // pred_check
        %p563 = pneg %p138
      $region38: #{forward.17} parent=35 // pred_check_branch
        %565 = sbr.rel (%p563) target = $region40
      $region39: #{forward.17} parent=35 // pred_region
        %s566 = smul.u32 2, %s20
      $region40: #{forward.17} parent=35 // pred_fallthru
        _
    $region36: #{forward.17} parent=5 // pred_fallthru
      _
    %p567 = scmp.le.s32.totalorder 2, %s10
    // Predicated region
    $region41: #{forward.17} parent=5 // pred_check
      %p568 = pneg %p567
    $region42: #{forward.17} parent=5 // pred_check_branch
      %570 = sbr.rel (%p568) target = $region44
    $region43: #{forward.17} parent=5 // pred_region
      %s571 = ssub.s32 %s10, 2
      // Predicated region
      $region45: #{forward.17} parent=43 // pred_check
        %p572 = pneg %p144
      $region46: #{forward.17} parent=43 // pred_check_branch
        %574 = sbr.rel (%p572) target = $region48
      $region47: #{forward.17} parent=43 // pred_region
        %s575 = smul.u32 2, %s22
        %p576 = scmp.lt.s32.totalorder %s21, 1
        %s577 = scalar_select %p576, %s21, 1
        %p578 = scmp.lt.s32.totalorder %s575, 1
        %s579 = scalar_select %p578, %s575, 1
        %s580 = smul.addr %s577, 16
        %s581 = sadd.s32 %s579, %s580
        %s582 = smul.addr %s581, 8
        %s583 = scalar_lea.vmem %s4, %s582
      $region48: #{forward.17} parent=43 // pred_fallthru
        _
    $region44: #{forward.17} parent=5 // pred_fallthru
      _
  $region6: #{forward.17} parent=0 // loop_footer
    %s14 = sadd.s32 1, %s10
  $region7: #{forward.17} parent=0 // loop_footer_branch
    %9 = sbr.rel target = $region3
  $region8: #{forward.17} parent=0 // loop_exit
    _

// kernel: forward.18
$region0: #{forward.18}
  #allocation0 [shape = 'u32[]', space=smem, size = 0x4, offset = 0x4, fixed_abs, tag = 'smem constant byte address 0x4 - core index']
  #allocation1 [shape = 'u32[144,128]{1,0:T(1,128)}', space=vmem, size = 0x12000, scoped, tag = 'internal scratch']
  %s0 = inlined_call_operand.vmem [shape: f32[2,576,256], index: 0, kind: input, shape index: {}]
  %s1 = inlined_call_operand.vmem [shape: f32[64,576], index: 1, kind: input, shape index: {}]
  %s2 = inlined_call_operand.vmem [shape: f32[64,1], index: 2, kind: input, shape index: {}]
  %s3 = inlined_call_operand.vmem [shape: f32[64,1], index: 3, kind: input, shape index: {}]
  %s4 = inlined_call_operand.vmem [shape: f32[2,64,256], index: 4, kind: output, shape index: {}]
  %s5 = sld [smem:[#allocation0]]
  $region49: #{forward.18} parent=0
    _
  %s7 = ssub.s32 1, %s5
  %s8 = scalar_select 0, %s7, %s5
  loop: start=0, step=1, limit=4
  $region2: #{forward.18} parent=0 // loop_pre_header
    _
  $region3: #{forward.18} parent=0 // loop_header
    %s10 = sphi 0, %s14
    %p11 = scmp.ge.s32.totalorder %s10, 4
    %s17 = sphi 0, %s29
    %s18 = sphi 0, %s25
    %s19 = sphi 0, %s17
    %s20 = sphi 0, %s18
    %s21 = sphi 0, %s19
    %s22 = sphi 0, %s20
    %s34 = sphi 0, %s36
    %s37 = sphi 0, %s34
    %s38 = sphi 0, %s37
    %s54 = sphi 0, %s38
    %s58 = sphi 0, %s58
    %s60 = sphi 0, %s58
    %s61 = sphi 0, %s60
    %s75 = sphi 0, %s61
    %s79 = sphi 0, %s79
    %s81 = sphi 0, %s79
    %s82 = sphi 0, %s81
    %s96 = sphi 0, %s82
    %s100 = sphi 0, %s100
    %s102 = sphi 0, %s100
    %s103 = sphi 0, %s102
    %s117 = sphi 0, %s103
    %s125 = sphi 0, %s127
    %s128 = sphi 0, %s125
    %s129 = sphi 0, %s128
    %s145 = sphi 0, %s129
  $region4: #{forward.18} parent=0 // loop_header_branch
    %13 = sbr.rel (%p11) target = $region8
  $region5: #{forward.18} parent=0 // loop_body
    %s15 = ssub.s32 %s10, 1
    %s16 = ssub.s32 %s10, 2
    %s23 = sadd.s32 1, %s18
    %p24 = scmp.ge.s32.totalorder %s23, 1
    %s25 = scalar_select %p24, 0, %s23
    %s26 = sadd.s32 1, %s17
    %s27 = scalar_select %p24, %s26, %s17
    %p28 = scmp.ge.s32.totalorder %s27, 2
    %s29 = scalar_select %p28, 0, %s27
    %s30 = ssub.s32 %s17, %s29
    %s31 = ssub.s32 %s18, %s25
    %s32 = sor.u32 %s30, %s31
    %p33 = scmp.eq.s32.totalorder %s32, 0
    %s35 = sadd.s32 %s34, 1
    %s36 = scalar_select %p33, %s34, %s35
    %p39 = pneg %p33
    %p40 = scmp.eq.s32.totalorder %s10, 1
    %p41 = por %p39, %p40
    %p42 = scmp.ne.s32.totalorder %s34, %s37
    %p43 = scmp.eq.s32.totalorder %s10, 0
    %p44 = por %p42, %p43
    %p45 = scmp.ne.s32.totalorder %s34, %s37
    %p46 = scmp.eq.s32.totalorder %s15, 1
    %p47 = por %p45, %p46
    %p48 = scmp.ne.s32.totalorder %s37, %s38
    %p49 = scmp.eq.s32.totalorder %s15, 0
    %p50 = por %p48, %p49
    %p51 = scmp.ne.s32.totalorder %s37, %s38
    %p52 = scmp.eq.s32.totalorder %s16, 1
    %p53 = por %p51, %p52
    %p55 = scmp.ne.s32.totalorder %s38, %s54
    %p56 = scmp.eq.s32.totalorder %s16, 0
    %p57 = por %p55, %p56
    %s59 = sadd.s32 %s58, 1
    %p62 = scmp.eq.s32.totalorder %s10, 1
    %p63 = scmp.ne.s32.totalorder %s58, %s60
    %p64 = scmp.eq.s32.totalorder %s10, 0
    %p65 = por %p63, %p64
    %p66 = scmp.ne.s32.totalorder %s58, %s60
    %p67 = scmp.eq.s32.totalorder %s15, 1
    %p68 = por %p66, %p67
    %p69 = scmp.ne.s32.totalorder %s60, %s61
    %p70 = scmp.eq.s32.totalorder %s15, 0
    %p71 = por %p69, %p70
    %p72 = scmp.ne.s32.totalorder %s60, %s61
    %p73 = scmp.eq.s32.totalorder %s16, 1
    %p74 = por %p72, %p73
    %p76 = scmp.ne.s32.totalorder %s61, %s75
    %p77 = scmp.eq.s32.totalorder %s16, 0
    %p78 = por %p76, %p77
    %s80 = sadd.s32 %s79, 1
    %p83 = scmp.eq.s32.totalorder %s10, 1
    %p84 = scmp.ne.s32.totalorder %s79, %s81
    %p85 = scmp.eq.s32.totalorder %s10, 0
    %p86 = por %p84, %p85
    %p87 = scmp.ne.s32.totalorder %s79, %s81
    %p88 = scmp.eq.s32.totalorder %s15, 1
    %p89 = por %p87, %p88
    %p90 = scmp.ne.s32.totalorder %s81, %s82
    %p91 = scmp.eq.s32.totalorder %s15, 0
    %p92 = por %p90, %p91
    %p93 = scmp.ne.s32.totalorder %s81, %s82
    %p94 = scmp.eq.s32.totalorder %s16, 1
    %p95 = por %p93, %p94
    %p97 = scmp.ne.s32.totalorder %s82, %s96
    %p98 = scmp.eq.s32.totalorder %s16, 0
    %p99 = por %p97, %p98
    %s101 = sadd.s32 %s100, 1
    %p104 = scmp.eq.s32.totalorder %s10, 1
    %p105 = scmp.ne.s32.totalorder %s100, %s102
    %p106 = scmp.eq.s32.totalorder %s10, 0
    %p107 = por %p105, %p106
    %p108 = scmp.ne.s32.totalorder %s100, %s102
    %p109 = scmp.eq.s32.totalorder %s15, 1
    %p110 = por %p108, %p109
    %p111 = scmp.ne.s32.totalorder %s102, %s103
    %p112 = scmp.eq.s32.totalorder %s15, 0
    %p113 = por %p111, %p112
    %p114 = scmp.ne.s32.totalorder %s102, %s103
    %p115 = scmp.eq.s32.totalorder %s16, 1
    %p116 = por %p114, %p115
    %p118 = scmp.ne.s32.totalorder %s103, %s117
    %p119 = scmp.eq.s32.totalorder %s16, 0
    %p120 = por %p118, %p119
    %s121 = ssub.s32 %s17, %s29
    %s122 = ssub.s32 %s18, %s25
    %s123 = sor.u32 %s121, %s122
    %p124 = scmp.eq.s32.totalorder %s123, 0
    %s126 = sadd.s32 %s125, 1
    %s127 = scalar_select %p124, %s125, %s126
    %p130 = pneg %p124
    %p131 = scmp.eq.s32.totalorder %s10, 1
    %p132 = por %p130, %p131
    %p133 = scmp.ne.s32.totalorder %s125, %s128
    %p134 = scmp.eq.s32.totalorder %s10, 0
    %p135 = por %p133, %p134
    %p136 = scmp.ne.s32.totalorder %s125, %s128
    %p137 = scmp.eq.s32.totalorder %s15, 1
    %p138 = por %p136, %p137
    %p139 = scmp.ne.s32.totalorder %s128, %s129
    %p140 = scmp.eq.s32.totalorder %s15, 0
    %p141 = por %p139, %p140
    %p142 = scmp.ne.s32.totalorder %s128, %s129
    %p143 = scmp.eq.s32.totalorder %s16, 1
    %p144 = por %p142, %p143
    %p146 = scmp.ne.s32.totalorder %s129, %s145
    %p147 = scmp.eq.s32.totalorder %s16, 0
    %p148 = por %p146, %p147
    %p149 = scmp.le.s32.totalorder 1, %s10
    %p150 = scmp.lt.s32.totalorder %s10, 3
    %p151 = pnand %p149, %p150
    %p152 = pneg %p151
    // Predicated region
    $region9: #{forward.18} parent=5 // pred_check
      _
    $region10: #{forward.18} parent=5 // pred_check_branch
      %154 = sbr.rel (%p151) target = $region12
    $region11: #{forward.18} parent=5 // pred_region
      %s155 = ssub.s32 %s10, 1
      // Predicated region
      $region13: #{forward.18} parent=11 // pred_check
        %p156 = pneg %p71
      $region14: #{forward.18} parent=11 // pred_check_branch
        %158 = sbr.rel (%p156) target = $region16
      $region15: #{forward.18} parent=11 // pred_region
        _
      $region16: #{forward.18} parent=11 // pred_fallthru
        _
      // Predicated region
      $region17: #{forward.18} parent=11 // pred_check
        %p159 = pneg %p92
      $region18: #{forward.18} parent=11 // pred_check_branch
        %161 = sbr.rel (%p159) target = $region20
      $region19: #{forward.18} parent=11 // pred_region
        _
      $region20: #{forward.18} parent=11 // pred_fallthru
        _
      // Predicated region
      $region21: #{forward.18} parent=11 // pred_check
        %p162 = pneg %p113
      $region22: #{forward.18} parent=11 // pred_check_branch
        %164 = sbr.rel (%p162) target = $region24
      $region23: #{forward.18} parent=11 // pred_region
        _
      $region24: #{forward.18} parent=11 // pred_fallthru
        _
    $region12: #{forward.18} parent=5 // pred_fallthru
      _
    %p165 = scmp.lt.s32.totalorder %s10, 2
    // Predicated region
    $region25: #{forward.18} parent=5 // pred_check
      %p166 = pneg %p165
    $region26: #{forward.18} parent=5 // pred_check_branch
      %168 = sbr.rel (%p166) target = $region28
    $region27: #{forward.18} parent=5 // pred_region
      // Predicated region
      $region29: #{forward.18} parent=27 // pred_check
        %p169 = pneg %p44
      $region30: #{forward.18} parent=27 // pred_check_branch
        %171 = sbr.rel (%p169) target = $region32
      $region31: #{forward.18} parent=27 // pred_region
        %s172 = smul.u32 2, %s18
        %p173 = scmp.lt.s32.totalorder %s17, 1
        %s174 = scalar_select %p173, %s17, 1
        %p175 = scmp.lt.s32.totalorder %s172, 1
        %s176 = scalar_select %p175, %s172, 1
        %s177 = smul.addr %s174, 144
        %s178 = sadd.s32 %s176, %s177
        %s179 = smul.addr %s178, 8
        %s180 = scalar_lea.vmem %s0, %s179
        %s181 = smul.u32 2, %s18
      $region32: #{forward.18} parent=27 // pred_fallthru
        _
    $region28: #{forward.18} parent=5 // pred_fallthru
      _
    %p182 = scmp.le.s32.totalorder 1, %s10
    %p183 = scmp.lt.s32.totalorder %s10, 3
    %p184 = pnand %p182, %p183
    %p185 = pneg %p184
    // Predicated region
    $region33: #{forward.18} parent=5 // pred_check
      _
    $region34: #{forward.18} parent=5 // pred_check_branch
      %187 = sbr.rel (%p184) target = $region36
    $region35: #{forward.18} parent=5 // pred_region
      %s188 = ssub.s32 %s10, 1
      %s189 = smul.u32 2, %s20
      %p190 = scmp.lt.s32.totalorder %s19, 1
      %s191 = scalar_select %p190, %s19, 1
      %p192 = scmp.lt.s32.totalorder %s189, 1
      %s193 = scalar_select %p192, %s189, 1
      %s194 = smul.addr %s191, 144
      %s195 = sadd.s32 %s193, %s194
      %s196 = smul.addr %s195, 8
      %s197 = scalar_lea.vmem %s0, %s196
      %p198 = pneg %p50
      %p199 = pneg %p47
      %p200 = pneg %p71
      %p201 = pneg %p68
      %p202 = pneg %p92
      %p203 = pneg %p89
      %p204 = pneg %p113
      %p205 = pneg %p110
      %p206 = pneg %p141
      %p207 = pneg %p138
      %s208 = smul.u32 2, %s20
      %p209 = scmp.lt.s32.totalorder %s19, 1
      %s210 = scalar_select %p209, %s19, 1
      %p211 = scmp.lt.s32.totalorder %s208, 1
      %s212 = scalar_select %p211, %s208, 1
      %s213 = smul.addr %s210, 16
      %s214 = sadd.s32 %s212, %s213
      %s215 = smul.addr %s214, 8
      %s216 = scalar_lea.vmem %s4, %s215
      %s217 = smul.u32 2, %s20
      %p218 = scmp.lt.s32.totalorder %s19, 1
      %s219 = scalar_select %p218, %s19, 1
      %p220 = scmp.lt.s32.totalorder %s217, 1
      %s221 = scalar_select %p220, %s217, 1
      %s222 = smul.addr %s219, 144
      %s223 = sadd.s32 %s221, %s222
      %s224 = smul.addr %s223, 8
      %s225 = scalar_lea.vmem %s0, %s224
      %s226 = smul.u32 2, %s20
      %s227 = smul.u32 2, %s20
      %p228 = scmp.lt.s32.totalorder %s19, 1
      %s229 = scalar_select %p228, %s19, 1
      %p230 = scmp.lt.s32.totalorder %s227, 1
      %s231 = scalar_select %p230, %s227, 1
      %s232 = smul.addr %s229, 16
      %s233 = sadd.s32 %s231, %s232
      %s234 = smul.addr %s233, 8
      %s235 = scalar_lea.vmem %s4, %s234
      %s236 = smul.u32 2, %s20
      %v237 = vld [vmem:[%s1] sm:$0xff]
      %v238 = vld [vmem:[%s1 + $0x8] sm:$0xff]
      %v239 = vld [vmem:[%s1 + $0x10] sm:$0xff]
      %v240 = vld [vmem:[%s1 + $0x18] sm:$0xff]
      %v241 = vld [vmem:[%s1 + $0x20] sm:$0xff]
      %v242 = vld [vmem:[%s1 + $0x28] sm:$0xff]
      %v243 = vld [vmem:[%s1 + $0x30] sm:$0xff]
      %v244 = vld [vmem:[%s1 + $0x38] sm:$0xff]
      %v245 = vld [vmem:[%s1 + $0x40] sm:$0xff]
      %v246 = vld [vmem:[%s1 + $0x48] sm:$0xff]
      %v247 = vld [vmem:[%s1 + $0x50] sm:$0xff]
      %v248 = vld [vmem:[%s1 + $0x58] sm:$0xff]
      %v249 = vld [vmem:[%s1 + $0x60] sm:$0xff]
      %v250 = vld [vmem:[%s1 + $0x68] sm:$0xff]
      %v251 = vld [vmem:[%s1 + $0x70] sm:$0xff]
      %v252 = vld [vmem:[%s1 + $0x78] sm:$0xff]
      %v253 = vld [vmem:[%s1 + $0x80] sm:$0xff]
      %v254 = vld [vmem:[%s1 + $0x88] sm:$0xff]
      %v255 = vld [vmem:[%s1 + $0x90] sm:$0xff]
      %v256 = vld [vmem:[%s1 + $0x98] sm:$0xff]
      %v257 = vld [vmem:[%s1 + $0xa0] sm:$0xff]
      %v258 = vld [vmem:[%s1 + $0xa8] sm:$0xff]
      %v259 = vld [vmem:[%s1 + $0xb0] sm:$0xff]
      %v260 = vld [vmem:[%s1 + $0xb8] sm:$0xff]
      %v261 = vld [vmem:[%s1 + $0xc0] sm:$0xff]
      %v262 = vld [vmem:[%s1 + $0xc8] sm:$0xff]
      %v263 = vld [vmem:[%s1 + $0xd0] sm:$0xff]
      %v264 = vld [vmem:[%s1 + $0xd8] sm:$0xff]
      %v265 = vld [vmem:[%s1 + $0xe0] sm:$0xff]
      %v266 = vld [vmem:[%s1 + $0xe8] sm:$0xff]
      %v267 = vld [vmem:[%s1 + $0xf0] sm:$0xff]
      %v268 = vld [vmem:[%s1 + $0xf8] sm:$0xff]
      %v269 = vld [vmem:[%s1 + $0x100] sm:$0xff]
      %v270 = vld [vmem:[%s1 + $0x108] sm:$0xff]
      %v271 = vld [vmem:[%s1 + $0x110] sm:$0xff]
      %v272 = vld [vmem:[%s1 + $0x118] sm:$0xff]
      %v273 = vld [vmem:[%s1 + $0x120] sm:$0xff]
      %v274 = vld [vmem:[%s1 + $0x128] sm:$0xff]
      %v275 = vld [vmem:[%s1 + $0x130] sm:$0xff]
      %v276 = vld [vmem:[%s1 + $0x138] sm:$0xff]
      %v277 = vld [vmem:[%s225] sm:$0xff]
      %v278 = vld [vmem:[%s225 + $0x8] sm:$0xff]
      %v279 = vld [vmem:[%s225 + $0x10] sm:$0xff]
      %v280 = vld [vmem:[%s225 + $0x18] sm:$0xff]
      %v281 = vld [vmem:[%s225 + $0x20] sm:$0xff]
      %v282 = vld [vmem:[%s225 + $0x28] sm:$0xff]
      %v283 = vld [vmem:[%s225 + $0x30] sm:$0xff]
      %v284 = vld [vmem:[%s225 + $0x38] sm:$0xff]
      %v285 = vld [vmem:[%s225 + $0x40] sm:$0xff]
      %v286 = vld [vmem:[%s225 + $0x48] sm:$0xff]
      %v287 = vld [vmem:[%s225 + $0x50] sm:$0xff]
      %v288 = vld [vmem:[%s225 + $0x58] sm:$0xff]
      %v289 = vld [vmem:[%s225 + $0x60] sm:$0xff]
      %v290 = vld [vmem:[%s225 + $0x68] sm:$0xff]
      %v291 = vld [vmem:[%s225 + $0x70] sm:$0xff]
      %v292 = vld [vmem:[%s225 + $0x78] sm:$0xff]
      %v293 = vld [vmem:[%s225 + $0x80] sm:$0xff]
      %v294 = vld [vmem:[%s225 + $0x88] sm:$0xff]
      %v295 = vld [vmem:[%s225 + $0x90] sm:$0xff]
      %v296 = vld [vmem:[%s225 + $0x98] sm:$0xff]
      %v297 = vld [vmem:[%s225 + $0xa0] sm:$0xff]
      %v298 = vld [vmem:[%s225 + $0xa8] sm:$0xff]
      %v299 = vld [vmem:[%s225 + $0xb0] sm:$0xff]
      %v300 = vld [vmem:[%s225 + $0xb8] sm:$0xff]
      %v301 = vld [vmem:[%s225 + $0xc0] sm:$0xff]
      %v302 = vld [vmem:[%s225 + $0xc8] sm:$0xff]
      %v303 = vld [vmem:[%s225 + $0xd0] sm:$0xff]
      %v304 = vld [vmem:[%s225 + $0xd8] sm:$0xff]
      %v305 = vld [vmem:[%s225 + $0xe0] sm:$0xff]
      %v306 = vld [vmem:[%s225 + $0xe8] sm:$0xff]
      %v307 = vld [vmem:[%s225 + $0xf0] sm:$0xff]
      %v308 = vld [vmem:[%s225 + $0xf8] sm:$0xff]
      %v309 = vld [vmem:[%s225 + $0x100] sm:$0xff]
      %v310 = vld [vmem:[%s225 + $0x108] sm:$0xff]
      %v311 = vld [vmem:[%s225 + $0x110] sm:$0xff]
      %v312 = vld [vmem:[%s225 + $0x118] sm:$0xff]
      %v313 = vld [vmem:[%s225 + $0x120] sm:$0xff]
      %v314 = vld [vmem:[%s225 + $0x128] sm:$0xff]
      %v315 = vld [vmem:[%s225 + $0x130] sm:$0xff]
      %v316 = vld [vmem:[%s225 + $0x138] sm:$0xff]
      %v317 = vld [vmem:[%s225 + $0x140] sm:$0xff]
      %v318 = vld [vmem:[%s225 + $0x148] sm:$0xff]
      %v319 = vld [vmem:[%s225 + $0x150] sm:$0xff]
      %v320 = vld [vmem:[%s225 + $0x158] sm:$0xff]
      %v321 = vld [vmem:[%s225 + $0x160] sm:$0xff]
      %v322 = vld [vmem:[%s225 + $0x168] sm:$0xff]
      %v323 = vld [vmem:[%s225 + $0x170] sm:$0xff]
      %v324 = vld [vmem:[%s225 + $0x178] sm:$0xff]
      %v325 = vld [vmem:[%s225 + $0x180] sm:$0xff]
      %v326 = vld [vmem:[%s225 + $0x188] sm:$0xff]
      %v327 = vld [vmem:[%s225 + $0x190] sm:$0xff]
      %v328 = vld [vmem:[%s225 + $0x198] sm:$0xff]
      %v329 = vld [vmem:[%s225 + $0x1a0] sm:$0xff]
      %v330 = vld [vmem:[%s225 + $0x1a8] sm:$0xff]
      %v331 = vld [vmem:[%s225 + $0x1b0] sm:$0xff]
      %v332 = vld [vmem:[%s225 + $0x1b8] sm:$0xff]
      %v333 = vld [vmem:[%s225 + $0x1c0] sm:$0xff]
      %v334 = vld [vmem:[%s225 + $0x1c8] sm:$0xff]
      %v335 = vld [vmem:[%s225 + $0x1d0] sm:$0xff]
      %v336 = vld [vmem:[%s225 + $0x1d8] sm:$0xff]
      %v337 = vld [vmem:[%s225 + $0x1e0] sm:$0xff]
      %v338 = vld [vmem:[%s225 + $0x1e8] sm:$0xff]
      %v339 = vld [vmem:[%s225 + $0x1f0] sm:$0xff]
      %v340 = vld [vmem:[%s225 + $0x1f8] sm:$0xff]
      %v341 = vld [vmem:[%s225 + $0x200] sm:$0xff]
      %v342 = vld [vmem:[%s225 + $0x208] sm:$0xff]
      %v343 = vld [vmem:[%s225 + $0x210] sm:$0xff]
      %v344 = vld [vmem:[%s225 + $0x218] sm:$0xff]
      %v345 = vld [vmem:[%s225 + $0x220] sm:$0xff]
      %v346 = vld [vmem:[%s225 + $0x228] sm:$0xff]
      %v347 = vld [vmem:[%s225 + $0x230] sm:$0xff]
      %v348 = vld [vmem:[%s225 + $0x238] sm:$0xff]
      %v349 = vld [vmem:[%s225 + $0x240] sm:$0xff]
      %v350 = vld [vmem:[%s225 + $0x248] sm:$0xff]
      %v351 = vld [vmem:[%s225 + $0x250] sm:$0xff]
      %v352 = vld [vmem:[%s225 + $0x258] sm:$0xff]
      %v353 = vld [vmem:[%s225 + $0x260] sm:$0xff]
      %v354 = vld [vmem:[%s225 + $0x268] sm:$0xff]
      %v355 = vld [vmem:[%s225 + $0x270] sm:$0xff]
      %v356 = vld [vmem:[%s225 + $0x278] sm:$0xff]
      %v357 = vld [vmem:[%s225 + $0x280] sm:$0xff]
      %v358 = vld [vmem:[%s225 + $0x288] sm:$0xff]
      %v359 = vld [vmem:[%s225 + $0x290] sm:$0xff]
      %v360 = vld [vmem:[%s225 + $0x298] sm:$0xff]
      %v361 = vld [vmem:[%s225 + $0x2a0] sm:$0xff]
      %v362 = vld [vmem:[%s225 + $0x2a8] sm:$0xff]
      %v363 = vld [vmem:[%s225 + $0x2b0] sm:$0xff]
      %v364 = vld [vmem:[%s225 + $0x2b8] sm:$0xff]
      %v365 = vld [vmem:[%s225 + $0x2c0] sm:$0xff]
      %v366 = vld [vmem:[%s225 + $0x2c8] sm:$0xff]
      %v367 = vld [vmem:[%s225 + $0x2d0] sm:$0xff]
      %v368 = vld [vmem:[%s225 + $0x2d8] sm:$0xff]
      %v369 = vld [vmem:[%s225 + $0x2e0] sm:$0xff]
      %v370 = vld [vmem:[%s225 + $0x2e8] sm:$0xff]
      %v371 = vld [vmem:[%s225 + $0x2f0] sm:$0xff]
      %v372 = vld [vmem:[%s225 + $0x2f8] sm:$0xff]
      %v373 = vld [vmem:[%s225 + $0x300] sm:$0xff]
      %v374 = vld [vmem:[%s225 + $0x308] sm:$0xff]
      %v375 = vld [vmem:[%s225 + $0x310] sm:$0xff]
      %v376 = vld [vmem:[%s225 + $0x318] sm:$0xff]
      %v377 = vld [vmem:[%s225 + $0x320] sm:$0xff]
      %v378 = vld [vmem:[%s225 + $0x328] sm:$0xff]
      %v379 = vld [vmem:[%s225 + $0x330] sm:$0xff]
      %v380 = vld [vmem:[%s225 + $0x338] sm:$0xff]
      %v381 = vld [vmem:[%s225 + $0x340] sm:$0xff]
      %v382 = vld [vmem:[%s225 + $0x348] sm:$0xff]
      %v383 = vld [vmem:[%s225 + $0x350] sm:$0xff]
      %v384 = vld [vmem:[%s225 + $0x358] sm:$0xff]
      %v385 = vld [vmem:[%s225 + $0x360] sm:$0xff]
      %v386 = vld [vmem:[%s225 + $0x368] sm:$0xff]
      %v387 = vld [vmem:[%s225 + $0x370] sm:$0xff]
      %v388 = vld [vmem:[%s225 + $0x378] sm:$0xff]
      %v389 = vld [vmem:[%s225 + $0x380] sm:$0xff]
      %v390 = vld [vmem:[%s225 + $0x388] sm:$0xff]
      %v391 = vld [vmem:[%s225 + $0x390] sm:$0xff]
      %v392 = vld [vmem:[%s225 + $0x398] sm:$0xff]
      %v393 = vld [vmem:[%s225 + $0x3a0] sm:$0xff]
      %v394 = vld [vmem:[%s225 + $0x3a8] sm:$0xff]
      %v395 = vld [vmem:[%s225 + $0x3b0] sm:$0xff]
      %v396 = vld [vmem:[%s225 + $0x3b8] sm:$0xff]
      %v397 = vld [vmem:[%s225 + $0x3c0] sm:$0xff]
      %v398 = vld [vmem:[%s225 + $0x3c8] sm:$0xff]
      %v399 = vld [vmem:[%s225 + $0x3d0] sm:$0xff]
      %v400 = vld [vmem:[%s225 + $0x3d8] sm:$0xff]
      %v401 = vld [vmem:[%s225 + $0x3e0] sm:$0xff]
      %v402 = vld [vmem:[%s225 + $0x3e8] sm:$0xff]
      %v403 = vld [vmem:[%s225 + $0x3f0] sm:$0xff]
      %v404 = vld [vmem:[%s225 + $0x3f8] sm:$0xff]
      %v405 = vld [vmem:[%s225 + $0x400] sm:$0xff]
      %v406 = vld [vmem:[%s225 + $0x408] sm:$0xff]
      %v407 = vld [vmem:[%s225 + $0x410] sm:$0xff]
      %v408 = vld [vmem:[%s225 + $0x418] sm:$0xff]
      %v409 = vld [vmem:[%s225 + $0x420] sm:$0xff]
      %v410 = vld [vmem:[%s225 + $0x428] sm:$0xff]
      %v411 = vld [vmem:[%s225 + $0x430] sm:$0xff]
      %v412 = vld [vmem:[%s225 + $0x438] sm:$0xff]
      %v413 = vld [vmem:[%s225 + $0x440] sm:$0xff]
      %v414 = vld [vmem:[%s225 + $0x448] sm:$0xff]
      %v415 = vld [vmem:[%s225 + $0x450] sm:$0xff]
      %v416 = vld [vmem:[%s225 + $0x458] sm:$0xff]
      %v417 = vld [vmem:[%s225 + $0x460] sm:$0xff]
      %v418 = vld [vmem:[%s225 + $0x468] sm:$0xff]
      %v419 = vld [vmem:[%s225 + $0x470] sm:$0xff]
      %v420 = vld [vmem:[%s225 + $0x478] sm:$0xff]
      %vm421 = vcmask 523264
      %v423 = vsel %vm421, %v241, 0
      %v426 = vsel %vm421, %v246, 0
      %v429 = vsel %vm421, %v251, 0
      %v432 = vsel %vm421, %v256, 0
      %v435 = vsel %vm421, %v261, 0
      %v438 = vsel %vm421, %v266, 0
      %v441 = vsel %vm421, %v271, 0
      %v444 = vsel %vm421, %v276, 0
      %446 = vmatprep.subr.mxu0 %v278
      %447 = vmatpush1.msra.mxu0 %v277
      %448 = vmatprep.subr.mxu0 %v280
      %449 = vmatpush1.msra.mxu0 %v279
      %450 = vmatprep.subr.mxu0 %v282
      %451 = vmatpush1.msra.mxu0 %v281
      %452 = vmatprep.subr.mxu0 %v284
      %453 = vmatpush1.msra.mxu0 %v283
      %454 = vmatprep.subr.mxu0 %v286
      %455 = vmatpush1.msra.mxu0 %v285
      %456 = vmatprep.subr.mxu0 %v288
      %457 = vmatpush1.msra.mxu0 %v287
      %458 = vmatprep.subr.mxu0 %v290
      %459 = vmatpush1.msra.mxu0 %v289
      %460 = vmatprep.subr.mxu0 %v292
      %461 = vmatpush1.msra.mxu0 %v291
      %462 = vmatprep.subr.mxu0 %v294
      %463 = vmatpush1.msra.mxu0 %v293
      %464 = vmatprep.subr.mxu0 %v296
      %465 = vmatpush1.msra.mxu0 %v295
      %466 = vmatprep.subr.mxu0 %v298
      %467 = vmatpush1.msra.mxu0 %v297
      %468 = vmatprep.subr.mxu0 %v300
      %469 = vmatpush1.msra.mxu0 %v299
      %470 = vmatprep.subr.mxu0 %v302
      %471 = vmatpush1.msra.mxu0 %v301
      %472 = vmatprep.subr.mxu0 %v304
      %473 = vmatpush1.msra.mxu0 %v303
      %474 = vmatprep.subr.mxu0 %v306
      %475 = vmatpush1.msra.mxu0 %v305
      %476 = vmatprep.subr.mxu0 %v308
      %477 = vmatpush1.msra.mxu0 %v307
      %478 = vmatprep.subr.mxu0 %v310
      %479 = vmatpush1.msra.mxu0 %v309
      %480 = vmatprep.subr.mxu0 %v312
      %481 = vmatpush1.msra.mxu0 %v311
      %482 = vmatprep.subr.mxu0 %v314
      %483 = vmatpush1.msra.mxu0 %v313
      %484 = vmatprep.subr.mxu0 %v316
      %485 = vmatpush1.msra.mxu0 %v315
      %486 = vmatprep.subr.mxu0 %v318
      %487 = vmatpush1.msra.mxu0 %v317
      %488 = vmatprep.subr.mxu0 %v320
      %489 = vmatpush1.msra.mxu0 %v319
      %490 = vmatprep.subr.mxu0 %v322
      %491 = vmatpush1.msra.mxu0 %v321
      %492 = vmatprep.subr.mxu0 %v324
      %493 = vmatpush1.msra.mxu0 %v323
      %494 = vmatprep.subr.mxu0 %v326
      %495 = vmatpush1.msra.mxu0 %v325
      %496 = vmatprep.subr.mxu0 %v328
      %497 = vmatpush1.msra.mxu0 %v327
      %498 = vmatprep.subr.mxu0 %v330
      %499 = vmatpush1.msra.mxu0 %v329
      %500 = vmatprep.subr.mxu0 %v332
      %501 = vmatpush1.msra.mxu0 %v331
      %502 = vmatprep.subr.mxu0 %v334
      %503 = vmatpush1.msra.mxu0 %v333
      %504 = vmatprep.subr.mxu0 %v336
      %505 = vmatpush1.msra.mxu0 %v335
      %506 = vmatprep.subr.mxu0 %v338
      %507 = vmatpush1.msra.mxu0 %v337
      %508 = vmatprep.subr.mxu0 %v340
      %509 = vmatpush1.msra.mxu0 %v339
      %510 = vmatprep.mubr.f32.mxu0 %v238
      %511 = vmatmul.mubr.f32.gmra.mrb[0].mxu0 %v237
      %v512 = vpop.f32.mrb[0].mxu0
      %v513 = vadd.f32 0.0, %v512
      %v514 = vpop.f32.mrb[0].mxu0
      %v515 = vadd.f32 0.0, %v514
      %516 = vmatprep.mubr.f32.mxu0 %v243
      %517 = vmatmul.mubr.f32.gmra.mrb[0].mxu0 %v242
      %v518 = vpop.f32.mrb[0].mxu0
      %v519 = vadd.f32 0.0, %v518
      %v520 = vpop.f32.mrb[0].mxu0
      %v521 = vadd.f32 0.0, %v520
      %522 = vmatprep.mubr.f32.mxu0 %v248
      %523 = vmatmul.mubr.f32.gmra.mrb[0].mxu0 %v247
      %v524 = vpop.f32.mrb[0].mxu0
      %v525 = vadd.f32 0.0, %v524
      %v526 = vpop.f32.mrb[0].mxu0
      %v527 = vadd.f32 0.0, %v526
      %528 = vmatprep.mubr.f32.mxu0 %v253
      %529 = vmatmul.mubr.f32.gmra.mrb[0].mxu0 %v252
      %v530 = vpop.f32.mrb[0].mxu0
      %v531 = vadd.f32 0.0, %v530
      %v532 = vpop.f32.mrb[0].mxu0
      %v533 = vadd.f32 0.0, %v532
      %534 = vmatprep.mubr.f32.mxu0 %v258
      %535 = vmatmul.mubr.f32.gmra.mrb[0].mxu0 %v257
      %v536 = vpop.f32.mrb[0].mxu0
      %v537 = vadd.f32 0.0, %v536
      %v538 = vpop.f32.mrb[0].mxu0
      %v539 = vadd.f32 0.0, %v538
      %540 = vmatprep.mubr.f32.mxu0 %v263
      %541 = vmatmul.mubr.f32.gmra.mrb[0].mxu0 %v262
      %v542 = vpop.f32.mrb[0].mxu0
      %v543 = vadd.f32 0.0, %v542
      %v544 = vpop.f32.mrb[0].mxu0
      %v545 = vadd.f32 0.0, %v544
      %546 = vmatprep.mubr.f32.mxu0 %v268
      %547 = vmatmul.mubr.f32.gmra.mrb[0].mxu0 %v267
      %v548 = vpop.f32.mrb[0].mxu0
      %v549 = vadd.f32 0.0, %v548
      %v550 = vpop.f32.mrb[0].mxu0
      %v551 = vadd.f32 0.0, %v550
      %552 = vmatprep.mubr.f32.mxu0 %v273
      %553 = vmatmul.mubr.f32.gmra.mrb[0].mxu0 %v272
      %v554 = vpop.f32.mrb[0].mxu0
      %v555 = vadd.f32 0.0, %v554
      %v556 = vpop.f32.mrb[0].mxu0
      %v557 = vadd.f32 0.0, %v556
      %558 = vdwg.mxu0
      %559 = vmatprep.subr.mxu0 %v342
      %560 = vmatpush1.msra.mxu0 %v341
      %561 = vmatprep.subr.mxu0 %v344
      %562 = vmatpush1.msra.mxu0 %v343
      %563 = vmatprep.subr.mxu0 %v346
      %564 = vmatpush1.msra.mxu0 %v345
      %565 = vmatprep.subr.mxu0 %v348
      %566 = vmatpush1.msra.mxu0 %v347
      %567 = vmatprep.subr.mxu0 %v350
      %568 = vmatpush1.msra.mxu0 %v349
      %569 = vmatprep.subr.mxu0 %v352
      %570 = vmatpush1.msra.mxu0 %v351
      %571 = vmatprep.subr.mxu0 %v354
      %572 = vmatpush1.msra.mxu0 %v353
      %573 = vmatprep.subr.mxu0 %v356
      %574 = vmatpush1.msra.mxu0 %v355
      %575 = vmatprep.subr.mxu0 %v358
      %576 = vmatpush1.msra.mxu0 %v357
      %577 = vmatprep.subr.mxu0 %v360
      %578 = vmatpush1.msra.mxu0 %v359
      %579 = vmatprep.subr.mxu0 %v362
      %580 = vmatpush1.msra.mxu0 %v361
      %581 = vmatprep.subr.mxu0 %v364
      %582 = vmatpush1.msra.mxu0 %v363
      %583 = vmatprep.subr.mxu0 %v366
      %584 = vmatpush1.msra.mxu0 %v365
      %585 = vmatprep.subr.mxu0 %v368
      %586 = vmatpush1.msra.mxu0 %v367
      %587 = vmatprep.subr.mxu0 %v370
      %588 = vmatpush1.msra.mxu0 %v369
      %589 = vmatprep.subr.mxu0 %v372
      %590 = vmatpush1.msra.mxu0 %v371
      %591 = vmatprep.subr.mxu0 %v374
      %592 = vmatpush1.msra.mxu0 %v373
      %593 = vmatprep.subr.mxu0 %v376
      %594 = vmatpush1.msra.mxu0 %v375
      %595 = vmatprep.subr.mxu0 %v378
      %596 = vmatpush1.msra.mxu0 %v377
      %597 = vmatprep.subr.mxu0 %v380
      %598 = vmatpush1.msra.mxu0 %v379
      %599 = vmatprep.subr.mxu0 %v382
      %600 = vmatpush1.msra.mxu0 %v381
      %601 = vmatprep.subr.mxu0 %v384
      %602 = vmatpush1.msra.mxu0 %v383
      %603 = vmatprep.subr.mxu0 %v386
      %604 = vmatpush1.msra.mxu0 %v385
      %605 = vmatprep.subr.mxu0 %v388
      %606 = vmatpush1.msra.mxu0 %v387
      %607 = vmatprep.subr.mxu0 %v390
      %608 = vmatpush1.msra.mxu0 %v389
      %609 = vmatprep.subr.mxu0 %v392
      %610 = vmatpush1.msra.mxu0 %v391
      %611 = vmatprep.subr.mxu0 %v394
      %612 = vmatpush1.msra.mxu0 %v393
      %613 = vmatprep.subr.mxu0 %v396
      %614 = vmatpush1.msra.mxu0 %v395
      %615 = vmatprep.subr.mxu0 %v398
      %616 = vmatpush1.msra.mxu0 %v397
      %617 = vmatprep.subr.mxu0 %v400
      %618 = vmatpush1.msra.mxu0 %v399
      %619 = vmatprep.subr.mxu0 %v402
      %620 = vmatpush1.msra.mxu0 %v401
      %621 = vmatprep.subr.mxu0 %v404
      %622 = vmatpush1.msra.mxu0 %v403
      %623 = vmatprep.mubr.f32.mxu0 %v240
      %624 = vmatmul.mubr.f32.gmra.mrb[0].mxu0 %v239
      %v625 = vpop.f32.mrb[0].mxu0
      %v626 = vadd.f32 %v513, %v625
      %v627 = vpop.f32.mrb[0].mxu0
      %v628 = vadd.f32 %v515, %v627
      %629 = vmatprep.mubr.f32.mxu0 %v245
      %630 = vmatmul.mubr.f32.gmra.mrb[0].mxu0 %v244
      %v631 = vpop.f32.mrb[0].mxu0
      %v632 = vadd.f32 %v519, %v631
      %v633 = vpop.f32.mrb[0].mxu0
      %v634 = vadd.f32 %v521, %v633
      %635 = vmatprep.mubr.f32.mxu0 %v250
      %636 = vmatmul.mubr.f32.gmra.mrb[0].mxu0 %v249
      %v637 = vpop.f32.mrb[0].mxu0
      %v638 = vadd.f32 %v525, %v637
      %v639 = vpop.f32.mrb[0].mxu0
      %v640 = vadd.f32 %v527, %v639
      %641 = vmatprep.mubr.f32.mxu0 %v255
      %642 = vmatmul.mubr.f32.gmra.mrb[0].mxu0 %v254
      %v643 = vpop.f32.mrb[0].mxu0
      %v644 = vadd.f32 %v531, %v643
      %v645 = vpop.f32.mrb[0].mxu0
      %v646 = vadd.f32 %v533, %v645
      %647 = vmatprep.mubr.f32.mxu0 %v260
      %648 = vmatmul.mubr.f32.gmra.mrb[0].mxu0 %v259
      %v649 = vpop.f32.mrb[0].mxu0
      %v650 = vadd.f32 %v537, %v649
      %v651 = vpop.f32.mrb[0].mxu0
      %v652 = vadd.f32 %v539, %v651
      %653 = vmatprep.mubr.f32.mxu0 %v265
      %654 = vmatmul.mubr.f32.gmra.mrb[0].mxu0 %v264
      %v655 = vpop.f32.mrb[0].mxu0
      %v656 = vadd.f32 %v543, %v655
      %v657 = vpop.f32.mrb[0].mxu0
      %v658 = vadd.f32 %v545, %v657
      %659 = vmatprep.mubr.f32.mxu0 %v270
      %660 = vmatmul.mubr.f32.gmra.mrb[0].mxu0 %v269
      %v661 = vpop.f32.mrb[0].mxu0
      %v662 = vadd.f32 %v549, %v661
      %v663 = vpop.f32.mrb[0].mxu0
      %v664 = vadd.f32 %v551, %v663
      %665 = vmatprep.mubr.f32.mxu0 %v275
      %666 = vmatmul.mubr.f32.gmra.mrb[0].mxu0 %v274
      %v667 = vpop.f32.mrb[0].mxu0
      %v668 = vadd.f32 %v555, %v667
      %v669 = vpop.f32.mrb[0].mxu0
      %v670 = vadd.f32 %v557, %v669
      %671 = vdwg.mxu0
      %672 = vmatprep.subr.mxu0 %v406
      %673 = vmatpush1.msra.mxu0 %v405
      %674 = vmatprep.subr.mxu0 %v408
      %675 = vmatpush1.msra.mxu0 %v407
      %676 = vmatprep.subr.mxu0 %v410
      %677 = vmatpush1.msra.mxu0 %v409
      %678 = vmatprep.subr.mxu0 %v412
      %679 = vmatpush1.msra.mxu0 %v411
      %680 = vmatprep.subr.mxu0 %v414
      %681 = vmatpush1.msra.mxu0 %v413
      %682 = vmatprep.subr.mxu0 %v416
      %683 = vmatpush1.msra.mxu0 %v415
      %684 = vmatprep.subr.mxu0 %v418
      %685 = vmatpush1.msra.mxu0 %v417
      %686 = vmatprep.subr.mxu0 %v420
      %687 = vmatpush1.msra.mxu0 %v419
      %688 = vmatprep.subr.mxu0 0.0
      %689 = vmatpush1.msra.mxu0 0.0
      %690 = vmatprep.subr.mxu0 0.0
      %691 = vmatpush1.msra.mxu0 0.0
      %692 = vmatprep.subr.mxu0 0.0
      %693 = vmatpush1.msra.mxu0 0.0
      %694 = vmatprep.subr.mxu0 0.0
      %695 = vmatpush1.msra.mxu0 0.0
      %696 = vmatprep.subr.mxu0 0.0
      %697 = vmatpush1.msra.mxu0 0.0
      %698 = vmatprep.subr.mxu0 0.0
      %699 = vmatpush1.msra.mxu0 0.0
      %700 = vmatprep.subr.mxu0 0.0
      %701 = vmatpush1.msra.mxu0 0.0
      %702 = vmatprep.subr.mxu0 0.0
      %703 = vmatpush1.msra.mxu0 0.0
      %704 = vmatprep.subr.mxu0 0.0
      %705 = vmatpush1.msra.mxu0 0.0
      %706 = vmatprep.subr.mxu0 0.0
      %707 = vmatpush1.msra.mxu0 0.0
      %708 = vmatprep.subr.mxu0 0.0
      %709 = vmatpush1.msra.mxu0 0.0
      %710 = vmatprep.subr.mxu0 0.0
      %711 = vmatpush1.msra.mxu0 0.0
      %712 = vmatprep.subr.mxu0 0.0
      %713 = vmatpush1.msra.mxu0 0.0
      %714 = vmatprep.subr.mxu0 0.0
      %715 = vmatpush1.msra.mxu0 0.0
      %716 = vmatprep.subr.mxu0 0.0
      %717 = vmatpush1.msra.mxu0 0.0
      %718 = vmatprep.subr.mxu0 0.0
      %719 = vmatpush1.msra.mxu0 0.0
      %720 = vmatprep.subr.mxu0 0.0
      %721 = vmatpush1.msra.mxu0 0.0
      %722 = vmatprep.subr.mxu0 0.0
      %723 = vmatpush1.msra.mxu0 0.0
      %724 = vmatprep.subr.mxu0 0.0
      %725 = vmatpush1.msra.mxu0 0.0
      %726 = vmatprep.subr.mxu0 0.0
      %727 = vmatpush1.msra.mxu0 0.0
      %728 = vmatprep.subr.mxu0 0.0
      %729 = vmatpush1.msra.mxu0 0.0
      %730 = vmatprep.subr.mxu0 0.0
      %731 = vmatpush1.msra.mxu0 0.0
      %732 = vmatprep.subr.mxu0 0.0
      %733 = vmatpush1.msra.mxu0 0.0
      %734 = vmatprep.subr.mxu0 0.0
      %735 = vmatpush1.msra.mxu0 0.0
      %736 = vmatprep.mubr.f32.mxu0 0.0
      %737 = vmatmul.mubr.f32.gmra.mrb[0].mxu0 %v423
      %v738 = vpop.f32.mrb[0].mxu0
      %v739 = vadd.f32 %v626, %v738
      %v740 = vpop.f32.mrb[0].mxu0
      %v741 = vadd.f32 %v628, %v740
      %742 = vmatprep.mubr.f32.mxu0 0.0
      %743 = vmatmul.mubr.f32.gmra.mrb[0].mxu0 %v426
      %v744 = vpop.f32.mrb[0].mxu0
      %v745 = vadd.f32 %v632, %v744
      %v746 = vpop.f32.mrb[0].mxu0
      %v747 = vadd.f32 %v634, %v746
      %748 = vmatprep.mubr.f32.mxu0 0.0
      %749 = vmatmul.mubr.f32.gmra.mrb[0].mxu0 %v429
      %v750 = vpop.f32.mrb[0].mxu0
      %v751 = vadd.f32 %v638, %v750
      %v752 = vpop.f32.mrb[0].mxu0
      %v753 = vadd.f32 %v640, %v752
      %754 = vmatprep.mubr.f32.mxu0 0.0
      %755 = vmatmul.mubr.f32.gmra.mrb[0].mxu0 %v432
      %v756 = vpop.f32.mrb[0].mxu0
      %v757 = vadd.f32 %v644, %v756
      %v758 = vpop.f32.mrb[0].mxu0
      %v759 = vadd.f32 %v646, %v758
      %760 = vmatprep.mubr.f32.mxu0 0.0
      %761 = vmatmul.mubr.f32.gmra.mrb[0].mxu0 %v435
      %v762 = vpop.f32.mrb[0].mxu0
      %v763 = vadd.f32 %v650, %v762
      %v764 = vpop.f32.mrb[0].mxu0
      %v765 = vadd.f32 %v652, %v764
      %766 = vmatprep.mubr.f32.mxu0 0.0
      %767 = vmatmul.mubr.f32.gmra.mrb[0].mxu0 %v438
      %v768 = vpop.f32.mrb[0].mxu0
      %v769 = vadd.f32 %v656, %v768
      %v770 = vpop.f32.mrb[0].mxu0
      %v771 = vadd.f32 %v658, %v770
      %772 = vmatprep.mubr.f32.mxu0 0.0
      %773 = vmatmul.mubr.f32.gmra.mrb[0].mxu0 %v441
      %v774 = vpop.f32.mrb[0].mxu0
      %v775 = vadd.f32 %v662, %v774
      %v776 = vpop.f32.mrb[0].mxu0
      %v777 = vadd.f32 %v664, %v776
      %778 = vmatprep.mubr.f32.mxu0 0.0
      %779 = vmatmul.mubr.f32.gmra.mrb[0].mxu0 %v444
      %v780 = vpop.f32.mrb[0].mxu0
      %v781 = vadd.f32 %v668, %v780
      %v782 = vpop.f32.mrb[0].mxu0
      %v783 = vadd.f32 %v670, %v782
      %784 = vdwg.mxu0
      %v785 = vld [vmem:[%s2] sm:$0xff]
      %v786 = vld [vmem:[%s2 + $0x8] sm:$0xff]
      %v787 = vld [vmem:[%s2 + $0x10] sm:$0xff]
      %v788 = vld [vmem:[%s2 + $0x18] sm:$0xff]
      %v789 = vld [vmem:[%s2 + $0x20] sm:$0xff]
      %v790 = vld [vmem:[%s2 + $0x28] sm:$0xff]
      %v791 = vld [vmem:[%s2 + $0x30] sm:$0xff]
      %v792 = vld [vmem:[%s2 + $0x38] sm:$0xff]
      %794 = vset.pattern.permute.xlu0 0
      %795 = vperm.xlu0 %794, %v785
      %v796 = vpop.permute.xlu0 %795
      %799 = vset.pattern.permute.xlu0 0
      %800 = vperm.xlu0 %799, %v786
      %v801 = vpop.permute.xlu0 %800
      %804 = vset.pattern.permute.xlu0 0
      %805 = vperm.xlu0 %804, %v787
      %v806 = vpop.permute.xlu0 %805
      %809 = vset.pattern.permute.xlu0 0
      %810 = vperm.xlu0 %809, %v788
      %v811 = vpop.permute.xlu0 %810
      %814 = vset.pattern.permute.xlu0 0
      %815 = vperm.xlu0 %814, %v789
      %v816 = vpop.permute.xlu0 %815
      %819 = vset.pattern.permute.xlu0 0
      %820 = vperm.xlu0 %819, %v790
      %v821 = vpop.permute.xlu0 %820
      %824 = vset.pattern.permute.xlu0 0
      %825 = vperm.xlu0 %824, %v791
      %v826 = vpop.permute.xlu0 %825
      %829 = vset.pattern.permute.xlu0 0
      %830 = vperm.xlu0 %829, %v792
      %v831 = vpop.permute.xlu0 %830
      %v833 = vmul.f32 %v739, %v796
      %v834 = vmul.f32 %v741, %v796
      %v835 = vmul.f32 %v745, %v801
      %v836 = vmul.f32 %v747, %v801
      %v837 = vmul.f32 %v751, %v806
      %v838 = vmul.f32 %v753, %v806
      %v839 = vmul.f32 %v757, %v811
      %v840 = vmul.f32 %v759, %v811
      %v841 = vmul.f32 %v763, %v816
      %v842 = vmul.f32 %v765, %v816
      %v843 = vmul.f32 %v769, %v821
      %v844 = vmul.f32 %v771, %v821
      %v845 = vmul.f32 %v775, %v826
      %v846 = vmul.f32 %v777, %v826
      %v847 = vmul.f32 %v781, %v831
      %v848 = vmul.f32 %v783, %v831
      %v849 = vld [vmem:[%s3] sm:$0xff]
      %v850 = vld [vmem:[%s3 + $0x8] sm:$0xff]
      %v851 = vld [vmem:[%s3 + $0x10] sm:$0xff]
      %v852 = vld [vmem:[%s3 + $0x18] sm:$0xff]
      %v853 = vld [vmem:[%s3 + $0x20] sm:$0xff]
      %v854 = vld [vmem:[%s3 + $0x28] sm:$0xff]
      %v855 = vld [vmem:[%s3 + $0x30] sm:$0xff]
      %v856 = vld [vmem:[%s3 + $0x38] sm:$0xff]
      %858 = vset.pattern.permute.xlu0 0
      %859 = vperm.xlu0 %858, %v849
      %v860 = vpop.permute.xlu0 %859
      %863 = vset.pattern.permute.xlu0 0
      %864 = vperm.xlu0 %863, %v850
      %v865 = vpop.permute.xlu0 %864
      %868 = vset.pattern.permute.xlu0 0
      %869 = vperm.xlu0 %868, %v851
      %v870 = vpop.permute.xlu0 %869
      %873 = vset.pattern.permute.xlu0 0
      %874 = vperm.xlu0 %873, %v852
      %v875 = vpop.permute.xlu0 %874
      %878 = vset.pattern.permute.xlu0 0
      %879 = vperm.xlu0 %878, %v853
      %v880 = vpop.permute.xlu0 %879
      %883 = vset.pattern.permute.xlu0 0
      %884 = vperm.xlu0 %883, %v854
      %v885 = vpop.permute.xlu0 %884
      %888 = vset.pattern.permute.xlu0 0
      %889 = vperm.xlu0 %888, %v855
      %v890 = vpop.permute.xlu0 %889
      %893 = vset.pattern.permute.xlu0 0
      %894 = vperm.xlu0 %893, %v856
      %v895 = vpop.permute.xlu0 %894
      %v897 = vadd.f32 %v833, %v860
      %v898 = vadd.f32 %v834, %v860
      %v899 = vadd.f32 %v835, %v865
      %v900 = vadd.f32 %v836, %v865
      %v901 = vadd.f32 %v837, %v870
      %v902 = vadd.f32 %v838, %v870
      %v903 = vadd.f32 %v839, %v875
      %v904 = vadd.f32 %v840, %v875
      %v905 = vadd.f32 %v841, %v880
      %v906 = vadd.f32 %v842, %v880
      %v907 = vadd.f32 %v843, %v885
      %v908 = vadd.f32 %v844, %v885
      %v909 = vadd.f32 %v845, %v890
      %v910 = vadd.f32 %v846, %v890
      %v911 = vadd.f32 %v847, %v895
      %v912 = vadd.f32 %v848, %v895
      %v913 = vmax.f32 %v897, 0.0
      %v914 = vmax.f32 %v898, 0.0
      %v915 = vmax.f32 %v899, 0.0
      %v916 = vmax.f32 %v900, 0.0
      %v917 = vmax.f32 %v901, 0.0
      %v918 = vmax.f32 %v902, 0.0
      %v919 = vmax.f32 %v903, 0.0
      %v920 = vmax.f32 %v904, 0.0
      %v921 = vmax.f32 %v905, 0.0
      %v922 = vmax.f32 %v906, 0.0
      %v923 = vmax.f32 %v907, 0.0
      %v924 = vmax.f32 %v908, 0.0
      %v925 = vmax.f32 %v909, 0.0
      %v926 = vmax.f32 %v910, 0.0
      %v927 = vmax.f32 %v911, 0.0
      %v928 = vmax.f32 %v912, 0.0
      %929 = vst [vmem:[%s235] sm:$0xff] %v913
      %930 = vst [vmem:[%s235 + $0x8] sm:$0xff] %v914
      %931 = vst [vmem:[%s235 + $0x10] sm:$0xff] %v915
      %932 = vst [vmem:[%s235 + $0x18] sm:$0xff] %v916
      %933 = vst [vmem:[%s235 + $0x20] sm:$0xff] %v917
      %934 = vst [vmem:[%s235 + $0x28] sm:$0xff] %v918
      %935 = vst [vmem:[%s235 + $0x30] sm:$0xff] %v919
      %936 = vst [vmem:[%s235 + $0x38] sm:$0xff] %v920
      %937 = vst [vmem:[%s235 + $0x40] sm:$0xff] %v921
      %938 = vst [vmem:[%s235 + $0x48] sm:$0xff] %v922
      %939 = vst [vmem:[%s235 + $0x50] sm:$0xff] %v923
      %940 = vst [vmem:[%s235 + $0x58] sm:$0xff] %v924
      %941 = vst [vmem:[%s235 + $0x60] sm:$0xff] %v925
      %942 = vst [vmem:[%s235 + $0x68] sm:$0xff] %v926
      %943 = vst [vmem:[%s235 + $0x70] sm:$0xff] %v927
      %944 = vst [vmem:[%s235 + $0x78] sm:$0xff] %v928
      %s945 = smul.u32 2, %s20
      %p946 = scmp.lt.s32.totalorder %s19, 1
      %s947 = scalar_select %p946, %s19, 1
      %p948 = scmp.lt.s32.totalorder %s945, 1
      %s949 = scalar_select %p948, %s945, 1
      %s950 = smul.addr %s947, 16
      %s951 = sadd.s32 %s949, %s950
      %s952 = smul.addr %s951, 8
      %s953 = scalar_lea.vmem %s4, %s952
      // Predicated region
      $region37: #{forward.18} parent=35 // pred_check
        %p954 = pneg %p138
      $region38: #{forward.18} parent=35 // pred_check_branch
        %956 = sbr.rel (%p954) target = $region40
      $region39: #{forward.18} parent=35 // pred_region
        %s957 = smul.u32 2, %s20
      $region40: #{forward.18} parent=35 // pred_fallthru
        _
    $region36: #{forward.18} parent=5 // pred_fallthru
      _
    %p958 = scmp.le.s32.totalorder 2, %s10
    // Predicated region
    $region41: #{forward.18} parent=5 // pred_check
      %p959 = pneg %p958
    $region42: #{forward.18} parent=5 // pred_check_branch
      %961 = sbr.rel (%p959) target = $region44
    $region43: #{forward.18} parent=5 // pred_region
      %s962 = ssub.s32 %s10, 2
      // Predicated region
      $region45: #{forward.18} parent=43 // pred_check
        %p963 = pneg %p144
      $region46: #{forward.18} parent=43 // pred_check_branch
        %965 = sbr.rel (%p963) target = $region48
      $region47: #{forward.18} parent=43 // pred_region
        %s966 = smul.u32 2, %s22
        %p967 = scmp.lt.s32.totalorder %s21, 1
        %s968 = scalar_select %p967, %s21, 1
        %p969 = scmp.lt.s32.totalorder %s966, 1
        %s970 = scalar_select %p969, %s966, 1
        %s971 = smul.addr %s968, 16
        %s972 = sadd.s32 %s970, %s971
        %s973 = smul.addr %s972, 8
        %s974 = scalar_lea.vmem %s4, %s973
      $region48: #{forward.18} parent=43 // pred_fallthru
        _
    $region44: #{forward.18} parent=5 // pred_fallthru
      _
  $region6: #{forward.18} parent=0 // loop_footer
    %s14 = sadd.s32 1, %s10
  $region7: #{forward.18} parent=0 // loop_footer_branch
    %9 = sbr.rel target = $region3
  $region8: #{forward.18} parent=0 // loop_exit
    _

// kernel: forward.33
$region0: #{forward.33}
  #allocation0 [shape = 'u32[]', space=smem, size = 0x4, offset = 0x4, fixed_abs, tag = 'smem constant byte address 0x4 - core index']
  #allocation1 [shape = 'u32[144,128]{1,0:T(1,128)}', space=vmem, size = 0x12000, scoped, tag = 'internal scratch']
  #allocation2 [shape = 'f32[1,1]{1,0:T(1,128)S(1)}', space=vmem, size = 0x200, scoped, tag = 'scoped memory for forward.33']
  #allocation3 [shape = 'f32[1,1]{1,0:T(1,128)S(1)}', space=vmem, size = 0x200, scoped, tag = 'scoped memory for forward.33']
  %s0 = inlined_call_operand.vmem [shape: f32[2,576,256], index: 0, kind: input, shape index: {}]
  %s1 = inlined_call_operand.vmem [shape: f32[1,576], index: 1, kind: input, shape index: {}]
  %s2 = inlined_call_operand.<no memory space> [shape: f32[1,1], index: 2, kind: input, shape index: {}]
  %s3 = inlined_call_operand.<no memory space> [shape: f32[1,1], index: 3, kind: input, shape index: {}]
  %s4 = inlined_call_operand.vmem [shape: f32[2,1,256], index: 4, kind: output, shape index: {}]
  %s5 = sld [smem:[#allocation0]]
  $region49: #{forward.33} parent=0
    _
  %s7 = ssub.s32 1, %s5
  %s8 = scalar_select 0, %s7, %s5
  %v9 = vstv %s2
  %10 = vst [vmem:[#allocation2] sm:$0x1] %v9
  %v11 = vstv %s3
  %12 = vst [vmem:[#allocation3] sm:$0x1] %v11
  loop: start=0, step=1, limit=4
  $region2: #{forward.33} parent=0 // loop_pre_header
    _
  $region3: #{forward.33} parent=0 // loop_header
    %s14 = sphi 0, %s18
    %p15 = scmp.ge.s32.totalorder %s14, 4
    %s21 = sphi 0, %s33
    %s22 = sphi 0, %s29
    %s23 = sphi 0, %s21
    %s24 = sphi 0, %s22
    %s25 = sphi 0, %s23
    %s26 = sphi 0, %s24
    %s38 = sphi 0, %s40
    %s41 = sphi 0, %s38
    %s42 = sphi 0, %s41
    %s58 = sphi 0, %s42
    %s62 = sphi 0, %s62
    %s64 = sphi 0, %s62
    %s65 = sphi 0, %s64
    %s79 = sphi 0, %s65
    %s83 = sphi 0, %s83
    %s85 = sphi 0, %s83
    %s86 = sphi 0, %s85
    %s100 = sphi 0, %s86
    %s104 = sphi 0, %s104
    %s106 = sphi 0, %s104
    %s107 = sphi 0, %s106
    %s121 = sphi 0, %s107
    %s129 = sphi 0, %s131
    %s132 = sphi 0, %s129
    %s133 = sphi 0, %s132
    %s149 = sphi 0, %s133
  $region4: #{forward.33} parent=0 // loop_header_branch
    %17 = sbr.rel (%p15) target = $region8
  $region5: #{forward.33} parent=0 // loop_body
    %s19 = ssub.s32 %s14, 1
    %s20 = ssub.s32 %s14, 2
    %s27 = sadd.s32 1, %s22
    %p28 = scmp.ge.s32.totalorder %s27, 1
    %s29 = scalar_select %p28, 0, %s27
    %s30 = sadd.s32 1, %s21
    %s31 = scalar_select %p28, %s30, %s21
    %p32 = scmp.ge.s32.totalorder %s31, 2
    %s33 = scalar_select %p32, 0, %s31
    %s34 = ssub.s32 %s21, %s33
    %s35 = ssub.s32 %s22, %s29
    %s36 = sor.u32 %s34, %s35
    %p37 = scmp.eq.s32.totalorder %s36, 0
    %s39 = sadd.s32 %s38, 1
    %s40 = scalar_select %p37, %s38, %s39
    %p43 = pneg %p37
    %p44 = scmp.eq.s32.totalorder %s14, 1
    %p45 = por %p43, %p44
    %p46 = scmp.ne.s32.totalorder %s38, %s41
    %p47 = scmp.eq.s32.totalorder %s14, 0
    %p48 = por %p46, %p47
    %p49 = scmp.ne.s32.totalorder %s38, %s41
    %p50 = scmp.eq.s32.totalorder %s19, 1
    %p51 = por %p49, %p50
    %p52 = scmp.ne.s32.totalorder %s41, %s42
    %p53 = scmp.eq.s32.totalorder %s19, 0
    %p54 = por %p52, %p53
    %p55 = scmp.ne.s32.totalorder %s41, %s42
    %p56 = scmp.eq.s32.totalorder %s20, 1
    %p57 = por %p55, %p56
    %p59 = scmp.ne.s32.totalorder %s42, %s58
    %p60 = scmp.eq.s32.totalorder %s20, 0
    %p61 = por %p59, %p60
    %s63 = sadd.s32 %s62, 1
    %p66 = scmp.eq.s32.totalorder %s14, 1
    %p67 = scmp.ne.s32.totalorder %s62, %s64
    %p68 = scmp.eq.s32.totalorder %s14, 0
    %p69 = por %p67, %p68
    %p70 = scmp.ne.s32.totalorder %s62, %s64
    %p71 = scmp.eq.s32.totalorder %s19, 1
    %p72 = por %p70, %p71
    %p73 = scmp.ne.s32.totalorder %s64, %s65
    %p74 = scmp.eq.s32.totalorder %s19, 0
    %p75 = por %p73, %p74
    %p76 = scmp.ne.s32.totalorder %s64, %s65
    %p77 = scmp.eq.s32.totalorder %s20, 1
    %p78 = por %p76, %p77
    %p80 = scmp.ne.s32.totalorder %s65, %s79
    %p81 = scmp.eq.s32.totalorder %s20, 0
    %p82 = por %p80, %p81
    %s84 = sadd.s32 %s83, 1
    %p87 = scmp.eq.s32.totalorder %s14, 1
    %p88 = scmp.ne.s32.totalorder %s83, %s85
    %p89 = scmp.eq.s32.totalorder %s14, 0
    %p90 = por %p88, %p89
    %p91 = scmp.ne.s32.totalorder %s83, %s85
    %p92 = scmp.eq.s32.totalorder %s19, 1
    %p93 = por %p91, %p92
    %p94 = scmp.ne.s32.totalorder %s85, %s86
    %p95 = scmp.eq.s32.totalorder %s19, 0
    %p96 = por %p94, %p95
    %p97 = scmp.ne.s32.totalorder %s85, %s86
    %p98 = scmp.eq.s32.totalorder %s20, 1
    %p99 = por %p97, %p98
    %p101 = scmp.ne.s32.totalorder %s86, %s100
    %p102 = scmp.eq.s32.totalorder %s20, 0
    %p103 = por %p101, %p102
    %s105 = sadd.s32 %s104, 1
    %p108 = scmp.eq.s32.totalorder %s14, 1
    %p109 = scmp.ne.s32.totalorder %s104, %s106
    %p110 = scmp.eq.s32.totalorder %s14, 0
    %p111 = por %p109, %p110
    %p112 = scmp.ne.s32.totalorder %s104, %s106
    %p113 = scmp.eq.s32.totalorder %s19, 1
    %p114 = por %p112, %p113
    %p115 = scmp.ne.s32.totalorder %s106, %s107
    %p116 = scmp.eq.s32.totalorder %s19, 0
    %p117 = por %p115, %p116
    %p118 = scmp.ne.s32.totalorder %s106, %s107
    %p119 = scmp.eq.s32.totalorder %s20, 1
    %p120 = por %p118, %p119
    %p122 = scmp.ne.s32.totalorder %s107, %s121
    %p123 = scmp.eq.s32.totalorder %s20, 0
    %p124 = por %p122, %p123
    %s125 = ssub.s32 %s21, %s33
    %s126 = ssub.s32 %s22, %s29
    %s127 = sor.u32 %s125, %s126
    %p128 = scmp.eq.s32.totalorder %s127, 0
    %s130 = sadd.s32 %s129, 1
    %s131 = scalar_select %p128, %s129, %s130
    %p134 = pneg %p128
    %p135 = scmp.eq.s32.totalorder %s14, 1
    %p136 = por %p134, %p135
    %p137 = scmp.ne.s32.totalorder %s129, %s132
    %p138 = scmp.eq.s32.totalorder %s14, 0
    %p139 = por %p137, %p138
    %p140 = scmp.ne.s32.totalorder %s129, %s132
    %p141 = scmp.eq.s32.totalorder %s19, 1
    %p142 = por %p140, %p141
    %p143 = scmp.ne.s32.totalorder %s132, %s133
    %p144 = scmp.eq.s32.totalorder %s19, 0
    %p145 = por %p143, %p144
    %p146 = scmp.ne.s32.totalorder %s132, %s133
    %p147 = scmp.eq.s32.totalorder %s20, 1
    %p148 = por %p146, %p147
    %p150 = scmp.ne.s32.totalorder %s133, %s149
    %p151 = scmp.eq.s32.totalorder %s20, 0
    %p152 = por %p150, %p151
    %p153 = scmp.le.s32.totalorder 1, %s14
    %p154 = scmp.lt.s32.totalorder %s14, 3
    %p155 = pnand %p153, %p154
    %p156 = pneg %p155
    // Predicated region
    $region9: #{forward.33} parent=5 // pred_check
      _
    $region10: #{forward.33} parent=5 // pred_check_branch
      %158 = sbr.rel (%p155) target = $region12
    $region11: #{forward.33} parent=5 // pred_region
      %s159 = ssub.s32 %s14, 1
      // Predicated region
      $region13: #{forward.33} parent=11 // pred_check
        %p160 = pneg %p75
      $region14: #{forward.33} parent=11 // pred_check_branch
        %162 = sbr.rel (%p160) target = $region16
      $region15: #{forward.33} parent=11 // pred_region
        _
      $region16: #{forward.33} parent=11 // pred_fallthru
        _
      // Predicated region
      $region17: #{forward.33} parent=11 // pred_check
        %p163 = pneg %p96
      $region18: #{forward.33} parent=11 // pred_check_branch
        %165 = sbr.rel (%p163) target = $region20
      $region19: #{forward.33} parent=11 // pred_region
        _
      $region20: #{forward.33} parent=11 // pred_fallthru
        _
      // Predicated region
      $region21: #{forward.33} parent=11 // pred_check
        %p166 = pneg %p117
      $region22: #{forward.33} parent=11 // pred_check_branch
        %168 = sbr.rel (%p166) target = $region24
      $region23: #{forward.33} parent=11 // pred_region
        _
      $region24: #{forward.33} parent=11 // pred_fallthru
        _
    $region12: #{forward.33} parent=5 // pred_fallthru
      _
    %p169 = scmp.lt.s32.totalorder %s14, 2
    // Predicated region
    $region25: #{forward.33} parent=5 // pred_check
      %p170 = pneg %p169
    $region26: #{forward.33} parent=5 // pred_check_branch
      %172 = sbr.rel (%p170) target = $region28
    $region27: #{forward.33} parent=5 // pred_region
      // Predicated region
      $region29: #{forward.33} parent=27 // pred_check
        %p173 = pneg %p48
      $region30: #{forward.33} parent=27 // pred_check_branch
        %175 = sbr.rel (%p173) target = $region32
      $region31: #{forward.33} parent=27 // pred_region
        %s176 = smul.u32 2, %s22
        %p177 = scmp.lt.s32.totalorder %s21, 1
        %s178 = scalar_select %p177, %s21, 1
        %p179 = scmp.lt.s32.totalorder %s176, 1
        %s180 = scalar_select %p179, %s176, 1
        %s181 = smul.addr %s178, 144
        %s182 = sadd.s32 %s180, %s181
        %s183 = smul.addr %s182, 8
        %s184 = scalar_lea.vmem %s0, %s183
        %s185 = smul.u32 2, %s22
      $region32: #{forward.33} parent=27 // pred_fallthru
        _
    $region28: #{forward.33} parent=5 // pred_fallthru
      _
    %p186 = scmp.le.s32.totalorder 1, %s14
    %p187 = scmp.lt.s32.totalorder %s14, 3
    %p188 = pnand %p186, %p187
    %p189 = pneg %p188
    // Predicated region
    $region33: #{forward.33} parent=5 // pred_check
      _
    $region34: #{forward.33} parent=5 // pred_check_branch
      %191 = sbr.rel (%p188) target = $region36
    $region35: #{forward.33} parent=5 // pred_region
      %s192 = ssub.s32 %s14, 1
      %s193 = smul.u32 2, %s24
      %p194 = scmp.lt.s32.totalorder %s23, 1
      %s195 = scalar_select %p194, %s23, 1
      %p196 = scmp.lt.s32.totalorder %s193, 1
      %s197 = scalar_select %p196, %s193, 1
      %s198 = smul.addr %s195, 144
      %s199 = sadd.s32 %s197, %s198
      %s200 = smul.addr %s199, 8
      %s201 = scalar_lea.vmem %s0, %s200
      %p202 = pneg %p54
      %p203 = pneg %p51
      %p204 = pneg %p75
      %p205 = pneg %p72
      %p206 = pneg %p96
      %p207 = pneg %p93
      %p208 = pneg %p117
      %p209 = pneg %p114
      %p210 = pneg %p145
      %p211 = pneg %p142
      %s212 = smul.u32 2, %s24
      %p213 = scmp.lt.s32.totalorder %s23, 1
      %s214 = scalar_select %p213, %s23, 1
      %p215 = scmp.lt.s32.totalorder %s212, 1
      %s216 = scalar_select %p215, %s212, 1
      %s217 = smul.addr %s214, 2
      %s218 = sadd.s32 %s216, %s217
      %s219 = scalar_lea.vmem %s4, %s218
      %s220 = smul.u32 2, %s24
      %p221 = scmp.lt.s32.totalorder %s23, 1
      %s222 = scalar_select %p221, %s23, 1
      %p223 = scmp.lt.s32.totalorder %s220, 1
      %s224 = scalar_select %p223, %s220, 1
      %s225 = smul.addr %s222, 144
      %s226 = sadd.s32 %s224, %s225
      %s227 = smul.addr %s226, 8
      %s228 = scalar_lea.vmem %s0, %s227
      %s229 = smul.u32 2, %s24
      %s230 = smul.u32 2, %s24
      %p231 = scmp.lt.s32.totalorder %s23, 1
      %s232 = scalar_select %p231, %s23, 1
      %p233 = scmp.lt.s32.totalorder %s230, 1
      %s234 = scalar_select %p233, %s230, 1
      %s235 = smul.addr %s232, 2
      %s236 = sadd.s32 %s234, %s235
      %s237 = scalar_lea.vmem %s4, %s236
      %s238 = smul.u32 2, %s24
      %v239 = vld [vmem:[%s1] sm:$0x1f]
      %v240 = vld [vmem:[%s228] sm:$0xff]
      %v241 = vld [vmem:[%s228 + $0x8] sm:$0xff]
      %v242 = vld [vmem:[%s228 + $0x10] sm:$0xff]
      %v243 = vld [vmem:[%s228 + $0x18] sm:$0xff]
      %v244 = vld [vmem:[%s228 + $0x20] sm:$0xff]
      %v245 = vld [vmem:[%s228 + $0x28] sm:$0xff]
      %v246 = vld [vmem:[%s228 + $0x30] sm:$0xff]
      %v247 = vld [vmem:[%s228 + $0x38] sm:$0xff]
      %v248 = vld [vmem:[%s228 + $0x40] sm:$0xff]
      %v249 = vld [vmem:[%s228 + $0x48] sm:$0xff]
      %v250 = vld [vmem:[%s228 + $0x50] sm:$0xff]
      %v251 = vld [vmem:[%s228 + $0x58] sm:$0xff]
      %v252 = vld [vmem:[%s228 + $0x60] sm:$0xff]
      %v253 = vld [vmem:[%s228 + $0x68] sm:$0xff]
      %v254 = vld [vmem:[%s228 + $0x70] sm:$0xff]
      %v255 = vld [vmem:[%s228 + $0x78] sm:$0xff]
      %v256 = vld [vmem:[%s228 + $0x80] sm:$0xff]
      %v257 = vld [vmem:[%s228 + $0x88] sm:$0xff]
      %v258 = vld [vmem:[%s228 + $0x90] sm:$0xff]
      %v259 = vld [vmem:[%s228 + $0x98] sm:$0xff]
      %v260 = vld [vmem:[%s228 + $0xa0] sm:$0xff]
      %v261 = vld [vmem:[%s228 + $0xa8] sm:$0xff]
      %v262 = vld [vmem:[%s228 + $0xb0] sm:$0xff]
      %v263 = vld [vmem:[%s228 + $0xb8] sm:$0xff]
      %v264 = vld [vmem:[%s228 + $0xc0] sm:$0xff]
      %v265 = vld [vmem:[%s228 + $0xc8] sm:$0xff]
      %v266 = vld [vmem:[%s228 + $0xd0] sm:$0xff]
      %v267 = vld [vmem:[%s228 + $0xd8] sm:$0xff]
      %v268 = vld [vmem:[%s228 + $0xe0] sm:$0xff]
      %v269 = vld [vmem:[%s228 + $0xe8] sm:$0xff]
      %v270 = vld [vmem:[%s228 + $0xf0] sm:$0xff]
      %v271 = vld [vmem:[%s228 + $0xf8] sm:$0xff]
      %v272 = vld [vmem:[%s228 + $0x100] sm:$0xff]
      %v273 = vld [vmem:[%s228 + $0x108] sm:$0xff]
      %v274 = vld [vmem:[%s228 + $0x110] sm:$0xff]
      %v275 = vld [vmem:[%s228 + $0x118] sm:$0xff]
      %v276 = vld [vmem:[%s228 + $0x120] sm:$0xff]
      %v277 = vld [vmem:[%s228 + $0x128] sm:$0xff]
      %v278 = vld [vmem:[%s228 + $0x130] sm:$0xff]
      %v279 = vld [vmem:[%s228 + $0x138] sm:$0xff]
      %v280 = vld [vmem:[%s228 + $0x140] sm:$0xff]
      %v281 = vld [vmem:[%s228 + $0x148] sm:$0xff]
      %v282 = vld [vmem:[%s228 + $0x150] sm:$0xff]
      %v283 = vld [vmem:[%s228 + $0x158] sm:$0xff]
      %v284 = vld [vmem:[%s228 + $0x160] sm:$0xff]
      %v285 = vld [vmem:[%s228 + $0x168] sm:$0xff]
      %v286 = vld [vmem:[%s228 + $0x170] sm:$0xff]
      %v287 = vld [vmem:[%s228 + $0x178] sm:$0xff]
      %v288 = vld [vmem:[%s228 + $0x180] sm:$0xff]
      %v289 = vld [vmem:[%s228 + $0x188] sm:$0xff]
      %v290 = vld [vmem:[%s228 + $0x190] sm:$0xff]
      %v291 = vld [vmem:[%s228 + $0x198] sm:$0xff]
      %v292 = vld [vmem:[%s228 + $0x1a0] sm:$0xff]
      %v293 = vld [vmem:[%s228 + $0x1a8] sm:$0xff]
      %v294 = vld [vmem:[%s228 + $0x1b0] sm:$0xff]
      %v295 = vld [vmem:[%s228 + $0x1b8] sm:$0xff]
      %v296 = vld [vmem:[%s228 + $0x1c0] sm:$0xff]
      %v297 = vld [vmem:[%s228 + $0x1c8] sm:$0xff]
      %v298 = vld [vmem:[%s228 + $0x1d0] sm:$0xff]
      %v299 = vld [vmem:[%s228 + $0x1d8] sm:$0xff]
      %v300 = vld [vmem:[%s228 + $0x1e0] sm:$0xff]
      %v301 = vld [vmem:[%s228 + $0x1e8] sm:$0xff]
      %v302 = vld [vmem:[%s228 + $0x1f0] sm:$0xff]
      %v303 = vld [vmem:[%s228 + $0x1f8] sm:$0xff]
      %v304 = vld [vmem:[%s228 + $0x200] sm:$0xff]
      %v305 = vld [vmem:[%s228 + $0x208] sm:$0xff]
      %v306 = vld [vmem:[%s228 + $0x210] sm:$0xff]
      %v307 = vld [vmem:[%s228 + $0x218] sm:$0xff]
      %v308 = vld [vmem:[%s228 + $0x220] sm:$0xff]
      %v309 = vld [vmem:[%s228 + $0x228] sm:$0xff]
      %v310 = vld [vmem:[%s228 + $0x230] sm:$0xff]
      %v311 = vld [vmem:[%s228 + $0x238] sm:$0xff]
      %v312 = vld [vmem:[%s228 + $0x240] sm:$0xff]
      %v313 = vld [vmem:[%s228 + $0x248] sm:$0xff]
      %v314 = vld [vmem:[%s228 + $0x250] sm:$0xff]
      %v315 = vld [vmem:[%s228 + $0x258] sm:$0xff]
      %v316 = vld [vmem:[%s228 + $0x260] sm:$0xff]
      %v317 = vld [vmem:[%s228 + $0x268] sm:$0xff]
      %v318 = vld [vmem:[%s228 + $0x270] sm:$0xff]
      %v319 = vld [vmem:[%s228 + $0x278] sm:$0xff]
      %v320 = vld [vmem:[%s228 + $0x280] sm:$0xff]
      %v321 = vld [vmem:[%s228 + $0x288] sm:$0xff]
      %v322 = vld [vmem:[%s228 + $0x290] sm:$0xff]
      %v323 = vld [vmem:[%s228 + $0x298] sm:$0xff]
      %v324 = vld [vmem:[%s228 + $0x2a0] sm:$0xff]
      %v325 = vld [vmem:[%s228 + $0x2a8] sm:$0xff]
      %v326 = vld [vmem:[%s228 + $0x2b0] sm:$0xff]
      %v327 = vld [vmem:[%s228 + $0x2b8] sm:$0xff]
      %v328 = vld [vmem:[%s228 + $0x2c0] sm:$0xff]
      %v329 = vld [vmem:[%s228 + $0x2c8] sm:$0xff]
      %v330 = vld [vmem:[%s228 + $0x2d0] sm:$0xff]
      %v331 = vld [vmem:[%s228 + $0x2d8] sm:$0xff]
      %v332 = vld [vmem:[%s228 + $0x2e0] sm:$0xff]
      %v333 = vld [vmem:[%s228 + $0x2e8] sm:$0xff]
      %v334 = vld [vmem:[%s228 + $0x2f0] sm:$0xff]
      %v335 = vld [vmem:[%s228 + $0x2f8] sm:$0xff]
      %v336 = vld [vmem:[%s228 + $0x300] sm:$0xff]
      %v337 = vld [vmem:[%s228 + $0x308] sm:$0xff]
      %v338 = vld [vmem:[%s228 + $0x310] sm:$0xff]
      %v339 = vld [vmem:[%s228 + $0x318] sm:$0xff]
      %v340 = vld [vmem:[%s228 + $0x320] sm:$0xff]
      %v341 = vld [vmem:[%s228 + $0x328] sm:$0xff]
      %v342 = vld [vmem:[%s228 + $0x330] sm:$0xff]
      %v343 = vld [vmem:[%s228 + $0x338] sm:$0xff]
      %v344 = vld [vmem:[%s228 + $0x340] sm:$0xff]
      %v345 = vld [vmem:[%s228 + $0x348] sm:$0xff]
      %v346 = vld [vmem:[%s228 + $0x350] sm:$0xff]
      %v347 = vld [vmem:[%s228 + $0x358] sm:$0xff]
      %v348 = vld [vmem:[%s228 + $0x360] sm:$0xff]
      %v349 = vld [vmem:[%s228 + $0x368] sm:$0xff]
      %v350 = vld [vmem:[%s228 + $0x370] sm:$0xff]
      %v351 = vld [vmem:[%s228 + $0x378] sm:$0xff]
      %v352 = vld [vmem:[%s228 + $0x380] sm:$0xff]
      %v353 = vld [vmem:[%s228 + $0x388] sm:$0xff]
      %v354 = vld [vmem:[%s228 + $0x390] sm:$0xff]
      %v355 = vld [vmem:[%s228 + $0x398] sm:$0xff]
      %v356 = vld [vmem:[%s228 + $0x3a0] sm:$0xff]
      %v357 = vld [vmem:[%s228 + $0x3a8] sm:$0xff]
      %v358 = vld [vmem:[%s228 + $0x3b0] sm:$0xff]
      %v359 = vld [vmem:[%s228 + $0x3b8] sm:$0xff]
      %v360 = vld [vmem:[%s228 + $0x3c0] sm:$0xff]
      %v361 = vld [vmem:[%s228 + $0x3c8] sm:$0xff]
      %v362 = vld [vmem:[%s228 + $0x3d0] sm:$0xff]
      %v363 = vld [vmem:[%s228 + $0x3d8] sm:$0xff]
      %v364 = vld [vmem:[%s228 + $0x3e0] sm:$0xff]
      %v365 = vld [vmem:[%s228 + $0x3e8] sm:$0xff]
      %v366 = vld [vmem:[%s228 + $0x3f0] sm:$0xff]
      %v367 = vld [vmem:[%s228 + $0x3f8] sm:$0xff]
      %v368 = vld [vmem:[%s228 + $0x400] sm:$0xff]
      %v369 = vld [vmem:[%s228 + $0x408] sm:$0xff]
      %v370 = vld [vmem:[%s228 + $0x410] sm:$0xff]
      %v371 = vld [vmem:[%s228 + $0x418] sm:$0xff]
      %v372 = vld [vmem:[%s228 + $0x420] sm:$0xff]
      %v373 = vld [vmem:[%s228 + $0x428] sm:$0xff]
      %v374 = vld [vmem:[%s228 + $0x430] sm:$0xff]
      %v375 = vld [vmem:[%s228 + $0x438] sm:$0xff]
      %v376 = vld [vmem:[%s228 + $0x440] sm:$0xff]
      %v377 = vld [vmem:[%s228 + $0x448] sm:$0xff]
      %v378 = vld [vmem:[%s228 + $0x450] sm:$0xff]
      %v379 = vld [vmem:[%s228 + $0x458] sm:$0xff]
      %v380 = vld [vmem:[%s228 + $0x460] sm:$0xff]
      %v381 = vld [vmem:[%s228 + $0x468] sm:$0xff]
      %v382 = vld [vmem:[%s228 + $0x470] sm:$0xff]
      %v383 = vld [vmem:[%s228 + $0x478] sm:$0xff]
      %v385 = vlaneseq
      %v386 = vshrl.u32 %v385, 7
      %v387 = vsub.s32 0, %v386
      %v388 = vrot.slane %v239, %v387
      %v389 = vlaneseq
      %v390 = vshrl.u32 %v389, 7
      %v391 = vsub.s32 1, %v390
      %v392 = vrot.slane %v239, %v391
      %v393 = vlaneseq
      %v394 = vshrl.u32 %v393, 7
      %v395 = vsub.s32 2, %v394
      %v396 = vrot.slane %v239, %v395
      %v397 = vlaneseq
      %v398 = vshrl.u32 %v397, 7
      %v399 = vsub.s32 3, %v398
      %v400 = vrot.slane %v239, %v399
      %v401 = vlaneseq
      %v402 = vshrl.u32 %v401, 7
      %v403 = vsub.s32 4, %v402
      %v404 = vrot.slane %v239, %v403
      %vm409 = vcmask 523264
      %v410 = vsel %vm409, %v404, 0
      %412 = vmatprep.subr.mxu0 %v241
      %413 = vmatpush1.msra.mxu0 %v240
      %414 = vmatprep.subr.mxu0 %v243
      %415 = vmatpush1.msra.mxu0 %v242
      %416 = vmatprep.subr.mxu0 %v245
      %417 = vmatpush1.msra.mxu0 %v244
      %418 = vmatprep.subr.mxu0 %v247
      %419 = vmatpush1.msra.mxu0 %v246
      %420 = vmatprep.subr.mxu0 %v249
      %421 = vmatpush1.msra.mxu0 %v248
      %422 = vmatprep.subr.mxu0 %v251
      %423 = vmatpush1.msra.mxu0 %v250
      %424 = vmatprep.subr.mxu0 %v253
      %425 = vmatpush1.msra.mxu0 %v252
      %426 = vmatprep.subr.mxu0 %v255
      %427 = vmatpush1.msra.mxu0 %v254
      %428 = vmatprep.subr.mxu0 %v257
      %429 = vmatpush1.msra.mxu0 %v256
      %430 = vmatprep.subr.mxu0 %v259
      %431 = vmatpush1.msra.mxu0 %v258
      %432 = vmatprep.subr.mxu0 %v261
      %433 = vmatpush1.msra.mxu0 %v260
      %434 = vmatprep.subr.mxu0 %v263
      %435 = vmatpush1.msra.mxu0 %v262
      %436 = vmatprep.subr.mxu0 %v265
      %437 = vmatpush1.msra.mxu0 %v264
      %438 = vmatprep.subr.mxu0 %v267
      %439 = vmatpush1.msra.mxu0 %v266
      %440 = vmatprep.subr.mxu0 %v269
      %441 = vmatpush1.msra.mxu0 %v268
      %442 = vmatprep.subr.mxu0 %v271
      %443 = vmatpush1.msra.mxu0 %v270
      %444 = vmatprep.subr.mxu0 %v273
      %445 = vmatpush1.msra.mxu0 %v272
      %446 = vmatprep.subr.mxu0 %v275
      %447 = vmatpush1.msra.mxu0 %v274
      %448 = vmatprep.subr.mxu0 %v277
      %449 = vmatpush1.msra.mxu0 %v276
      %450 = vmatprep.subr.mxu0 %v279
      %451 = vmatpush1.msra.mxu0 %v278
      %452 = vmatprep.subr.mxu0 %v281
      %453 = vmatpush1.msra.mxu0 %v280
      %454 = vmatprep.subr.mxu0 %v283
      %455 = vmatpush1.msra.mxu0 %v282
      %456 = vmatprep.subr.mxu0 %v285
      %457 = vmatpush1.msra.mxu0 %v284
      %458 = vmatprep.subr.mxu0 %v287
      %459 = vmatpush1.msra.mxu0 %v286
      %460 = vmatprep.subr.mxu0 %v289
      %461 = vmatpush1.msra.mxu0 %v288
      %462 = vmatprep.subr.mxu0 %v291
      %463 = vmatpush1.msra.mxu0 %v290
      %464 = vmatprep.subr.mxu0 %v293
      %465 = vmatpush1.msra.mxu0 %v292
      %466 = vmatprep.subr.mxu0 %v295
      %467 = vmatpush1.msra.mxu0 %v294
      %468 = vmatprep.subr.mxu0 %v297
      %469 = vmatpush1.msra.mxu0 %v296
      %470 = vmatprep.subr.mxu0 %v299
      %471 = vmatpush1.msra.mxu0 %v298
      %472 = vmatprep.subr.mxu0 %v301
      %473 = vmatpush1.msra.mxu0 %v300
      %474 = vmatprep.subr.mxu0 %v303
      %475 = vmatpush1.msra.mxu0 %v302
      %476 = vmatprep.mubr.f32.mxu0 %v392
      %477 = vmatmul.mubr.f32.gmra.mrb[0].mxu0 %v388
      %v478 = vpop.f32.mrb[0].mxu0
      %v479 = vadd.f32 0.0, %v478
      %v480 = vpop.f32.mrb[0].mxu0
      %v481 = vadd.f32 0.0, %v480
      %482 = vdwg.mxu0
      %483 = vmatprep.subr.mxu0 %v305
      %484 = vmatpush1.msra.mxu0 %v304
      %485 = vmatprep.subr.mxu0 %v307
      %486 = vmatpush1.msra.mxu0 %v306
      %487 = vmatprep.subr.mxu0 %v309
      %488 = vmatpush1.msra.mxu0 %v308
      %489 = vmatprep.subr.mxu0 %v311
      %490 = vmatpush1.msra.mxu0 %v310
      %491 = vmatprep.subr.mxu0 %v313
      %492 = vmatpush1.msra.mxu0 %v312
      %493 = vmatprep.subr.mxu0 %v315
      %494 = vmatpush1.msra.mxu0 %v314
      %495 = vmatprep.subr.mxu0 %v317
      %496 = vmatpush1.msra.mxu0 %v316
      %497 = vmatprep.subr.mxu0 %v319
      %498 = vmatpush1.msra.mxu0 %v318
      %499 = vmatprep.subr.mxu0 %v321
      %500 = vmatpush1.msra.mxu0 %v320
      %501 = vmatprep.subr.mxu0 %v323
      %502 = vmatpush1.msra.mxu0 %v322
      %503 = vmatprep.subr.mxu0 %v325
      %504 = vmatpush1.msra.mxu0 %v324
      %505 = vmatprep.subr.mxu0 %v327
      %506 = vmatpush1.msra.mxu0 %v326
      %507 = vmatprep.subr.mxu0 %v329
      %508 = vmatpush1.msra.mxu0 %v328
      %509 = vmatprep.subr.mxu0 %v331
      %510 = vmatpush1.msra.mxu0 %v330
      %511 = vmatprep.subr.mxu0 %v333
      %512 = vmatpush1.msra.mxu0 %v332
      %513 = vmatprep.subr.mxu0 %v335
      %514 = vmatpush1.msra.mxu0 %v334
      %515 = vmatprep.subr.mxu0 %v337
      %516 = vmatpush1.msra.mxu0 %v336
      %517 = vmatprep.subr.mxu0 %v339
      %518 = vmatpush1.msra.mxu0 %v338
      %519 = vmatprep.subr.mxu0 %v341
      %520 = vmatpush1.msra.mxu0 %v340
      %521 = vmatprep.subr.mxu0 %v343
      %522 = vmatpush1.msra.mxu0 %v342
      %523 = vmatprep.subr.mxu0 %v345
      %524 = vmatpush1.msra.mxu0 %v344
      %525 = vmatprep.subr.mxu0 %v347
      %526 = vmatpush1.msra.mxu0 %v346
      %527 = vmatprep.subr.mxu0 %v349
      %528 = vmatpush1.msra.mxu0 %v348
      %529 = vmatprep.subr.mxu0 %v351
      %530 = vmatpush1.msra.mxu0 %v350
      %531 = vmatprep.subr.mxu0 %v353
      %532 = vmatpush1.msra.mxu0 %v352
      %533 = vmatprep.subr.mxu0 %v355
      %534 = vmatpush1.msra.mxu0 %v354
      %535 = vmatprep.subr.mxu0 %v357
      %536 = vmatpush1.msra.mxu0 %v356
      %537 = vmatprep.subr.mxu0 %v359
      %538 = vmatpush1.msra.mxu0 %v358
      %539 = vmatprep.subr.mxu0 %v361
      %540 = vmatpush1.msra.mxu0 %v360
      %541 = vmatprep.subr.mxu0 %v363
      %542 = vmatpush1.msra.mxu0 %v362
      %543 = vmatprep.subr.mxu0 %v365
      %544 = vmatpush1.msra.mxu0 %v364
      %545 = vmatprep.subr.mxu0 %v367
      %546 = vmatpush1.msra.mxu0 %v366
      %547 = vmatprep.mubr.f32.mxu0 %v400
      %548 = vmatmul.mubr.f32.gmra.mrb[0].mxu0 %v396
      %v549 = vpop.f32.mrb[0].mxu0
      %v550 = vadd.f32 %v479, %v549
      %v551 = vpop.f32.mrb[0].mxu0
      %v552 = vadd.f32 %v481, %v551
      %553 = vdwg.mxu0
      %554 = vmatprep.subr.mxu0 %v369
      %555 = vmatpush1.msra.mxu0 %v368
      %556 = vmatprep.subr.mxu0 %v371
      %557 = vmatpush1.msra.mxu0 %v370
      %558 = vmatprep.subr.mxu0 %v373
      %559 = vmatpush1.msra.mxu0 %v372
      %560 = vmatprep.subr.mxu0 %v375
      %561 = vmatpush1.msra.mxu0 %v374
      %562 = vmatprep.subr.mxu0 %v377
      %563 = vmatpush1.msra.mxu0 %v376
      %564 = vmatprep.subr.mxu0 %v379
      %565 = vmatpush1.msra.mxu0 %v378
      %566 = vmatprep.subr.mxu0 %v381
      %567 = vmatpush1.msra.mxu0 %v380
      %568 = vmatprep.subr.mxu0 %v383
      %569 = vmatpush1.msra.mxu0 %v382
      %570 = vmatprep.subr.mxu0 0.0
      %571 = vmatpush1.msra.mxu0 0.0
      %572 = vmatprep.subr.mxu0 0.0
      %573 = vmatpush1.msra.mxu0 0.0
      %574 = vmatprep.subr.mxu0 0.0
      %575 = vmatpush1.msra.mxu0 0.0
      %576 = vmatprep.subr.mxu0 0.0
      %577 = vmatpush1.msra.mxu0 0.0
      %578 = vmatprep.subr.mxu0 0.0
      %579 = vmatpush1.msra.mxu0 0.0
      %580 = vmatprep.subr.mxu0 0.0
      %581 = vmatpush1.msra.mxu0 0.0
      %582 = vmatprep.subr.mxu0 0.0
      %583 = vmatpush1.msra.mxu0 0.0
      %584 = vmatprep.subr.mxu0 0.0
      %585 = vmatpush1.msra.mxu0 0.0
      %586 = vmatprep.subr.mxu0 0.0
      %587 = vmatpush1.msra.mxu0 0.0
      %588 = vmatprep.subr.mxu0 0.0
      %589 = vmatpush1.msra.mxu0 0.0
      %590 = vmatprep.subr.mxu0 0.0
      %591 = vmatpush1.msra.mxu0 0.0
      %592 = vmatprep.subr.mxu0 0.0
      %593 = vmatpush1.msra.mxu0 0.0
      %594 = vmatprep.subr.mxu0 0.0
      %595 = vmatpush1.msra.mxu0 0.0
      %596 = vmatprep.subr.mxu0 0.0
      %597 = vmatpush1.msra.mxu0 0.0
      %598 = vmatprep.subr.mxu0 0.0
      %599 = vmatpush1.msra.mxu0 0.0
      %600 = vmatprep.subr.mxu0 0.0
      %601 = vmatpush1.msra.mxu0 0.0
      %602 = vmatprep.subr.mxu0 0.0
      %603 = vmatpush1.msra.mxu0 0.0
      %604 = vmatprep.subr.mxu0 0.0
      %605 = vmatpush1.msra.mxu0 0.0
      %606 = vmatprep.subr.mxu0 0.0
      %607 = vmatpush1.msra.mxu0 0.0
      %608 = vmatprep.subr.mxu0 0.0
      %609 = vmatpush1.msra.mxu0 0.0
      %610 = vmatprep.subr.mxu0 0.0
      %611 = vmatpush1.msra.mxu0 0.0
      %612 = vmatprep.subr.mxu0 0.0
      %613 = vmatpush1.msra.mxu0 0.0
      %614 = vmatprep.subr.mxu0 0.0
      %615 = vmatpush1.msra.mxu0 0.0
      %616 = vmatprep.subr.mxu0 0.0
      %617 = vmatpush1.msra.mxu0 0.0
      %618 = vmatprep.mubr.f32.mxu0 0.0
      %619 = vmatmul.mubr.f32.gmra.mrb[0].mxu0 %v410
      %v620 = vpop.f32.mrb[0].mxu0
      %v621 = vadd.f32 %v550, %v620
      %v622 = vpop.f32.mrb[0].mxu0
      %v623 = vadd.f32 %v552, %v622
      %624 = vdwg.mxu0
      %v625 = vld [vmem:[#allocation2] sm:$0x1]
      %627 = vset.pattern.permute.xlu0 0
      %628 = vperm.xlu0 %627, %v625
      %v629 = vpop.permute.xlu0 %628
      %v631 = vlaneseq
      %v632 = vshrl.u32 %v631, 7
      %v633 = vsub.s32 0, %v632
      %v634 = vrot.slane %v629, %v633
      %v635 = vmul.f32 %v621, %v634
      %v636 = vmul.f32 %v623, %v634
      %v637 = vld [vmem:[#allocation3] sm:$0x1]
      %639 = vset.pattern.permute.xlu0 0
      %640 = vperm.xlu0 %639, %v637
      %v641 = vpop.permute.xlu0 %640
      %v643 = vlaneseq
      %v644 = vshrl.u32 %v643, 7
      %v645 = vsub.s32 0, %v644
      %v646 = vrot.slane %v641, %v645
      %v647 = vadd.f32 %v635, %v646
      %v648 = vadd.f32 %v636, %v646
      %v651 = vcombine.low %v647, %v648
      %v653 = vunpack.c.l.s4 1966171168
      %v654 = vunpack.c.0.s8 %v653
      %v655 = vlaneseq
      %v656 = vshrl.u32 %v655, 7
      %v657 = vsub.s32 %v654, %v656
      %v658 = vrot.slane %v651, %v657
      %v660 = vunpack.c.l.s4 1966171168
      %v661 = vunpack.c.0.s8 %v660
      %v662 = vlaneseq
      %v663 = vshrl.u32 %v662, 7
      %v664 = vsub.s32 %v661, %v663
      %v665 = vrot.slane %v658, %v664
      %v667 = vlaneseq
      %vm668 = vcmp.ge.s32.totalorder %v667, 0
      %vm669 = vcmp.lt.s32.totalorder %v667, 256
      %vm670 = vmand %vm668, %vm669
      %671 = vst.msk [vmem:[%s237] sm:$0x3] %vm670, %v665
      %s672 = smul.u32 2, %s24
      %p673 = scmp.lt.s32.totalorder %s23, 1
      %s674 = scalar_select %p673, %s23, 1
      %p675 = scmp.lt.s32.totalorder %s672, 1
      %s676 = scalar_select %p675, %s672, 1
      %s677 = smul.addr %s674, 2
      %s678 = sadd.s32 %s676, %s677
      %s679 = scalar_lea.vmem %s4, %s678
      // Predicated region
      $region37: #{forward.33} parent=35 // pred_check
        %p680 = pneg %p142
      $region38: #{forward.33} parent=35 // pred_check_branch
        %682 = sbr.rel (%p680) target = $region40
      $region39: #{forward.33} parent=35 // pred_region
        %s683 = smul.u32 2, %s24
      $region40: #{forward.33} parent=35 // pred_fallthru
        _
    $region36: #{forward.33} parent=5 // pred_fallthru
      _
    %p684 = scmp.le.s32.totalorder 2, %s14
    // Predicated region
    $region41: #{forward.33} parent=5 // pred_check
      %p685 = pneg %p684
    $region42: #{forward.33} parent=5 // pred_check_branch
      %687 = sbr.rel (%p685) target = $region44
    $region43: #{forward.33} parent=5 // pred_region
      %s688 = ssub.s32 %s14, 2
      // Predicated region
      $region45: #{forward.33} parent=43 // pred_check
        %p689 = pneg %p148
      $region46: #{forward.33} parent=43 // pred_check_branch
        %691 = sbr.rel (%p689) target = $region48
      $region47: #{forward.33} parent=43 // pred_region
        %s692 = smul.u32 2, %s26
        %p693 = scmp.lt.s32.totalorder %s25, 1
        %s694 = scalar_select %p693, %s25, 1
        %p695 = scmp.lt.s32.totalorder %s692, 1
        %s696 = scalar_select %p695, %s692, 1
        %s697 = smul.addr %s694, 2
        %s698 = sadd.s32 %s696, %s697
        %s699 = scalar_lea.vmem %s4, %s698
      $region48: #{forward.33} parent=43 // pred_fallthru
        _
    $region44: #{forward.33} parent=5 // pred_fallthru
      _
  $region6: #{forward.33} parent=0 // loop_footer
    %s18 = sadd.s32 1, %s14
  $region7: #{forward.33} parent=0 // loop_footer_branch
    %13 = sbr.rel target = $region3
  $region8: #{forward.33} parent=0 // loop_exit
    _

</llo_original>
